<compile_context>
chip_gen: v7x
topology: tpu7x:2x2x1
jax: 0.10.0
libtpu: 0.0.40
codegen_flags: <defaults>
</compile_context>

<pallas_src>
import jax
import jax.numpy as jnp
from jax.experimental import pallas as pl
from jax.experimental.pallas import tpu as pltpu

HP = 128  # padded hidden size -> each gate occupies exactly one 128-lane slab


def lstm_kernel(x_ref, wih_ref, whh_ref, b_ref, wlin_ref, blin_ref,
                out_ref, xproj_ref):
    L = x_ref.shape[0]
    Hp = whh_ref.shape[0]

    # ---- input projection: computed once, staged through VMEM scratch so the
    #      recurrence reads row t with a plain VMEM load (no per-step XLU extract).
    if x_ref.shape[1] == 1:
        # input_size == 1: (L,1) * (1,4Hp) broadcast multiply — no MXU needed.
        xproj_ref[...] = x_ref[...] * wih_ref[...] + b_ref[...]          # (L, 4Hp) f32
    else:
        xproj_ref[...] = (jnp.dot(x_ref[...].astype(jnp.bfloat16),
                                  wih_ref[...].astype(jnp.bfloat16),
                                  preferred_element_type=jnp.float32)
                          + b_ref[...])

    # ---- recurrence: h/c live in vregs, loop fully unrolled (L is static).
    h = jnp.zeros((1, Hp), jnp.float32)
    c = jnp.zeros((1, Hp), jnp.float32)
    for t in range(L):
        # One fused recurrent matmul per step.  whh_ref is referenced inside the
        # dot (bf16 operands, f32 accumulation) — never hoisted into a long-lived
        # value spanning the unrolled steps.
        z = (jnp.dot(h.astype(jnp.bfloat16), whh_ref[...],
                     preferred_element_type=jnp.float32)
             + xproj_ref[t:t + 1, :])                                    # (1, 4Hp)

        # Gate order (i, f, g, o): the slabs feeding the c update are the first
        # three 128-lane result tiles; o (only needed after tanh(c)) is last.
        if_s = 0.5 * (jnp.tanh(0.5 * z[:, :2 * Hp]) + 1.0)   # sigmoid(i), sigmoid(f)
        g_t = jnp.tanh(z[:, 2 * Hp:3 * Hp])                  # tanh(g)
        o_s = 0.5 * (jnp.tanh(0.5 * z[:, 3 * Hp:]) + 1.0)    # sigmoid(o)

        c = if_s[:, Hp:] * c + if_s[:, :Hp] * g_t
        h = o_s * jnp.tanh(c)

    # ---- final Linear on the last hidden state (== pred[-1] of the PyTorch module):
    #      VPU multiply + lane reduction instead of an N=1 MXU matmul.
    out_ref[...] = (jnp.sum(h * wlin_ref[...], axis=-1, keepdims=True)
                    + blin_ref[...])


def _fuse_and_pad(w_ih, w_hh, b, w_lin, Hp):
    """Fuse gates into lane-dense slabs in PyTorch order (i, f, g, o), zero-pad
    H -> Hp.  The recurrent weight is returned in bf16; w_lin is transposed."""
    input_size, H = w_ih.shape[1], w_ih.shape[2]
    out_size = w_lin.shape[1]

    wih_f = jnp.zeros((input_size, 4 * Hp), jnp.float32)
    whh_f = jnp.zeros((Hp, 4 * Hp), jnp.float32)
    b_f = jnp.zeros((1, 4 * Hp), jnp.float32)
    for g in range(4):                       # identity permutation: (i, f, g, o)
        wih_f = wih_f.at[:, g * Hp:g * Hp + H].set(w_ih[g])
        whh_f = whh_f.at[:H, g * Hp:g * Hp + H].set(w_hh[g])
        b_f = b_f.at[:, g * Hp:g * Hp + H].set(b[g])
    wlin_r = jnp.zeros((out_size, Hp), jnp.float32).at[:, :H].set(w_lin.T)
    return wih_f, whh_f.astype(jnp.bfloat16), b_f, wlin_r


def lstm_forward(seq, w_ih, w_hh, b, w_lin, b_lin):
    # seq: (L,) or (L, input_size); PyTorch does seq.view(L, 1, -1)
    input_size = w_ih.shape[1]
    out_size = w_lin.shape[1]
    L = seq.shape[0]
    x = seq.reshape(L, input_size).astype(jnp.float32)

    wih_f, whh_f, b_f, wlin_r = _fuse_and_pad(w_ih, w_hh, b, w_lin, HP)
    blin_c = b_lin.reshape(out_size, 1).astype(jnp.float32)

    out = pl.pallas_call(
        lstm_kernel,
        out_shape=jax.ShapeDtypeStruct((out_size, 1), jnp.float32),
        in_specs=[pl.BlockSpec(memory_space=pltpu.MemorySpace.VMEM)] * 6,
        out_specs=pl.BlockSpec(memory_space=pltpu.MemorySpace.VMEM),
        scratch_shapes=[pltpu.VMEM((L, 4 * HP), jnp.float32)],
    )(x, wih_f, whh_f, b_f, wlin_r, blin_c)
    return out[:, 0]                          # shape (out_size,), == pred[-1]


def lstm_reference(seq, w_ih, w_hh, b, w_lin, b_lin):
    """Pure-JAX f32 reference mirroring torch.nn.LSTM + Linear (gate order i,f,g,o)."""
    input_size = w_ih.shape[1]
    H = w_ih.shape[2]
    L = seq.shape[0]
    x = seq.reshape(L, input_size).astype(jnp.float32)
    h = jnp.zeros((1, H), jnp.float32)
    c = jnp.zeros((1, H), jnp.float32)
    for t in range(L):
        x_t = x[t:t + 1]
        gates = [x_t @ w_ih[g] + h @ w_hh[g] + b[g] for g in range(4)]
        i_g = jax.nn.sigmoid(gates[0])
        f_g = jax.nn.sigmoid(gates[1])
        g_g = jnp.tanh(gates[2])
        o_g = jax.nn.sigmoid(gates[3])
        c = f_g * c + i_g * g_g
        h = o_g * jnp.tanh(c)
    return (h @ w_lin + b_lin)[0]


if __name__ == "__main__":
    L, input_size, H, out_size = 8, 1, 50, 1

    key = jax.random.PRNGKey(0)
    k1, k2, k3, k4, k5, k6, k7 = jax.random.split(key, 7)
    scale = 1.0 / float(jnp.sqrt(jnp.float32(H)))

    # deterministic synthetic parameters (shapes match nn.LSTM / nn.Linear)
    w_ih = jax.random.uniform(k1, (4, input_size, H), jnp.float32, -scale, scale)
    w_hh = jax.random.uniform(k2, (4, H, H), jnp.float32, -scale, scale)
    b_ih = jax.random.uniform(k3, (4, 1, H), jnp.float32, -scale, scale)
    b_hh = jax.random.uniform(k4, (4, 1, H), jnp.float32, -scale, scale)
    b = b_ih + b_hh
    w_lin = jax.random.uniform(k5, (H, out_size), jnp.float32, -scale, scale)
    b_lin = jax.random.uniform(k6, (1, out_size), jnp.float32, -scale, scale)

    seq = jax.random.normal(k7, (L,), jnp.float32)

    pred = jax.jit(lstm_forward)(seq, w_ih, w_hh, b, w_lin, b_lin)
    jax.block_until_ready(pred)

    ref = lstm_reference(seq, w_ih, w_hh, b, w_lin, b_lin)
    assert pred.shape == (out_size,)
    # Recurrent matmul uses bf16 operands (f32 accumulation); compare against the
    # f32 reference with a correspondingly relaxed tolerance.
    assert jnp.allclose(pred, ref, atol=2e-2, rtol=2e-2), (pred, ref)

    print("KERNEL_OK")
</pallas_src>

<mosaic_0001>
module attributes {stable_mosaic.version = 11 : i64} {
  func.func @lstm_kernel(%arg0: memref<8x1xf32, #tpu.memory_space<vmem>>, %arg1: memref<1x512xf32, #tpu.memory_space<vmem>>, %arg2: memref<128x512xbf16, #tpu.memory_space<vmem>>, %arg3: memref<1x512xf32, #tpu.memory_space<vmem>>, %arg4: memref<1x128xf32, #tpu.memory_space<vmem>>, %arg5: memref<1x1xf32, #tpu.memory_space<vmem>>, %arg6: memref<1x1xf32, #tpu.memory_space<vmem>>, %arg7: memref<8x512xf32, #tpu.memory_space<vmem>>) attributes {dimension_semantics = [], scalar_prefetch = 0 : i64, scratch_operands = 1 : i64, tpu.core_type = #tpu.core_type<tc>} {
    %c0 = arith.constant 0 : index
    %c0_0 = arith.constant 0 : index
    %0 = vector.load %arg0[%c0, %c0_0] : memref<8x1xf32, #tpu.memory_space<vmem>>, vector<8x1xf32>
    %c0_1 = arith.constant 0 : index
    %c0_2 = arith.constant 0 : index
    %1 = vector.load %arg1[%c0_1, %c0_2] : memref<1x512xf32, #tpu.memory_space<vmem>>, vector<1x512xf32>
    %2 = vector.broadcast %0 : vector<8x1xf32> to vector<8x512xf32>
    %3 = vector.broadcast %1 : vector<1x512xf32> to vector<8x512xf32>
    %4 = arith.mulf %2, %3 : vector<8x512xf32>
    %c0_3 = arith.constant 0 : index
    %c0_4 = arith.constant 0 : index
    %5 = vector.load %arg3[%c0_3, %c0_4] : memref<1x512xf32, #tpu.memory_space<vmem>>, vector<1x512xf32>
    %6 = vector.broadcast %5 : vector<1x512xf32> to vector<8x512xf32>
    %7 = arith.addf %4, %6 : vector<8x512xf32>
    %c0_5 = arith.constant 0 : index
    %c0_6 = arith.constant 0 : index
    %8 = vector.load %arg7[%c0_5, %c0_6] : memref<8x512xf32, #tpu.memory_space<vmem>>, vector<8x512xf32>
    tpu.vector_store %arg7[%c0_5, %c0_6], %7 {strides = array<i32>} : memref<8x512xf32, #tpu.memory_space<vmem>>, vector<8x512xf32>,
    %cst = arith.constant 0.000000e+00 : f32
    %9 = vector.broadcast %cst : f32 to vector<1x128xf32>
    %cst_7 = arith.constant 0.000000e+00 : f32
    %10 = vector.broadcast %cst_7 : f32 to vector<1x128xf32>
    %11 = arith.truncf %9 : vector<1x128xf32> to vector<1x128xbf16>
    %c0_8 = arith.constant 0 : index
    %c0_9 = arith.constant 0 : index
    %12 = vector.load %arg2[%c0_8, %c0_9] : memref<128x512xbf16, #tpu.memory_space<vmem>>, vector<128x512xbf16>
    %cst_10 = arith.constant dense<0.000000e+00> : vector<1x512xf32>
    %13 = tpu.matmul %11, %12, %cst_10 {dimension_numbers = #tpu.dot_dimension_numbers<[1], [0], [0], [1], [0, 0, 1, 1], [], []>} : vector<1x128xbf16>, vector<128x512xbf16>, vector<1x512xf32> -> vector<1x512xf32>
    %c0_11 = arith.constant 0 : index
    %c0_12 = arith.constant 0 : index
    %14 = vector.load %arg7[%c0_11, %c0_12] : memref<8x512xf32, #tpu.memory_space<vmem>>, vector<1x512xf32>
    %15 = arith.addf %13, %14 : vector<1x512xf32>
    %16 = vector.extract_strided_slice %15 {offsets = [0, 0], sizes = [1, 256], strides = [1, 1]} : vector<1x512xf32> to vector<1x256xf32>
    %cst_13 = arith.constant 5.000000e-01 : f32
    %17 = vector.broadcast %cst_13 : f32 to vector<1x256xf32>
    %18 = arith.mulf %17, %16 : vector<1x256xf32>
    %19 = math.tanh %18 : vector<1x256xf32>
    %cst_14 = arith.constant 1.000000e+00 : f32
    %20 = vector.broadcast %cst_14 : f32 to vector<1x256xf32>
    %21 = arith.addf %19, %20 : vector<1x256xf32>
    %cst_15 = arith.constant 5.000000e-01 : f32
    %22 = vector.broadcast %cst_15 : f32 to vector<1x256xf32>
    %23 = arith.mulf %22, %21 : vector<1x256xf32>
    %24 = vector.extract_strided_slice %15 {offsets = [0, 256], sizes = [1, 128], strides = [1, 1]} : vector<1x512xf32> to vector<1x128xf32>
    %25 = math.tanh %24 : vector<1x128xf32>
    %26 = vector.extract_strided_slice %15 {offsets = [0, 384], sizes = [1, 128], strides = [1, 1]} : vector<1x512xf32> to vector<1x128xf32>
    %cst_16 = arith.constant 5.000000e-01 : f32
    %27 = vector.broadcast %cst_16 : f32 to vector<1x128xf32>
    %28 = arith.mulf %27, %26 : vector<1x128xf32>
    %29 = math.tanh %28 : vector<1x128xf32>
    %cst_17 = arith.constant 1.000000e+00 : f32
    %30 = vector.broadcast %cst_17 : f32 to vector<1x128xf32>
    %31 = arith.addf %29, %30 : vector<1x128xf32>
    %cst_18 = arith.constant 5.000000e-01 : f32
    %32 = vector.broadcast %cst_18 : f32 to vector<1x128xf32>
    %33 = arith.mulf %32, %31 : vector<1x128xf32>
    %34 = vector.extract_strided_slice %23 {offsets = [0, 128], sizes = [1, 128], strides = [1, 1]} : vector<1x256xf32> to vector<1x128xf32>
    %35 = arith.mulf %34, %10 : vector<1x128xf32>
    %36 = vector.extract_strided_slice %23 {offsets = [0, 0], sizes = [1, 128], strides = [1, 1]} : vector<1x256xf32> to vector<1x128xf32>
    %37 = arith.mulf %36, %25 : vector<1x128xf32>
    %38 = arith.addf %35, %37 : vector<1x128xf32>
    %39 = math.tanh %38 : vector<1x128xf32>
    %40 = arith.mulf %33, %39 : vector<1x128xf32>
    %41 = arith.truncf %40 : vector<1x128xf32> to vector<1x128xbf16>
    %c0_19 = arith.constant 0 : index
    %c0_20 = arith.constant 0 : index
    %42 = vector.load %arg2[%c0_19, %c0_20] : memref<128x512xbf16, #tpu.memory_space<vmem>>, vector<128x512xbf16>
    %cst_21 = arith.constant dense<0.000000e+00> : vector<1x512xf32>
    %43 = tpu.matmul %41, %42, %cst_21 {dimension_numbers = #tpu.dot_dimension_numbers<[1], [0], [0], [1], [0, 0, 1, 1], [], []>} : vector<1x128xbf16>, vector<128x512xbf16>, vector<1x512xf32> -> vector<1x512xf32>
    %c1 = arith.constant 1 : index
    %c0_22 = arith.constant 0 : index
    %44 = vector.load %arg7[%c1, %c0_22] : memref<8x512xf32, #tpu.memory_space<vmem>>, vector<1x512xf32>
    %45 = arith.addf %43, %44 : vector<1x512xf32>
    %46 = vector.extract_strided_slice %45 {offsets = [0, 0], sizes = [1, 256], strides = [1, 1]} : vector<1x512xf32> to vector<1x256xf32>
    %cst_23 = arith.constant 5.000000e-01 : f32
    %47 = vector.broadcast %cst_23 : f32 to vector<1x256xf32>
    %48 = arith.mulf %47, %46 : vector<1x256xf32>
    %49 = math.tanh %48 : vector<1x256xf32>
    %cst_24 = arith.constant 1.000000e+00 : f32
    %50 = vector.broadcast %cst_24 : f32 to vector<1x256xf32>
    %51 = arith.addf %49, %50 : vector<1x256xf32>
    %cst_25 = arith.constant 5.000000e-01 : f32
    %52 = vector.broadcast %cst_25 : f32 to vector<1x256xf32>
    %53 = arith.mulf %52, %51 : vector<1x256xf32>
    %54 = vector.extract_strided_slice %45 {offsets = [0, 256], sizes = [1, 128], strides = [1, 1]} : vector<1x512xf32> to vector<1x128xf32>
    %55 = math.tanh %54 : vector<1x128xf32>
    %56 = vector.extract_strided_slice %45 {offsets = [0, 384], sizes = [1, 128], strides = [1, 1]} : vector<1x512xf32> to vector<1x128xf32>
    %cst_26 = arith.constant 5.000000e-01 : f32
    %57 = vector.broadcast %cst_26 : f32 to vector<1x128xf32>
    %58 = arith.mulf %57, %56 : vector<1x128xf32>
    %59 = math.tanh %58 : vector<1x128xf32>
    %cst_27 = arith.constant 1.000000e+00 : f32
    %60 = vector.broadcast %cst_27 : f32 to vector<1x128xf32>
    %61 = arith.addf %59, %60 : vector<1x128xf32>
    %cst_28 = arith.constant 5.000000e-01 : f32
    %62 = vector.broadcast %cst_28 : f32 to vector<1x128xf32>
    %63 = arith.mulf %62, %61 : vector<1x128xf32>
    %64 = vector.extract_strided_slice %53 {offsets = [0, 128], sizes = [1, 128], strides = [1, 1]} : vector<1x256xf32> to vector<1x128xf32>
    %65 = arith.mulf %64, %38 : vector<1x128xf32>
    %66 = vector.extract_strided_slice %53 {offsets = [0, 0], sizes = [1, 128], strides = [1, 1]} : vector<1x256xf32> to vector<1x128xf32>
    %67 = arith.mulf %66, %55 : vector<1x128xf32>
    %68 = arith.addf %65, %67 : vector<1x128xf32>
    %69 = math.tanh %68 : vector<1x128xf32>
    %70 = arith.mulf %63, %69 : vector<1x128xf32>
    %71 = arith.truncf %70 : vector<1x128xf32> to vector<1x128xbf16>
    %c0_29 = arith.constant 0 : index
    %c0_30 = arith.constant 0 : index
    %72 = vector.load %arg2[%c0_29, %c0_30] : memref<128x512xbf16, #tpu.memory_space<vmem>>, vector<128x512xbf16>
    %cst_31 = arith.constant dense<0.000000e+00> : vector<1x512xf32>
    %73 = tpu.matmul %71, %72, %cst_31 {dimension_numbers = #tpu.dot_dimension_numbers<[1], [0], [0], [1], [0, 0, 1, 1], [], []>} : vector<1x128xbf16>, vector<128x512xbf16>, vector<1x512xf32> -> vector<1x512xf32>
    %c2 = arith.constant 2 : index
    %c0_32 = arith.constant 0 : index
    %74 = vector.load %arg7[%c2, %c0_32] : memref<8x512xf32, #tpu.memory_space<vmem>>, vector<1x512xf32>
    %75 = arith.addf %73, %74 : vector<1x512xf32>
    %76 = vector.extract_strided_slice %75 {offsets = [0, 0], sizes = [1, 256], strides = [1, 1]} : vector<1x512xf32> to vector<1x256xf32>
    %cst_33 = arith.constant 5.000000e-01 : f32
    %77 = vector.broadcast %cst_33 : f32 to vector<1x256xf32>
    %78 = arith.mulf %77, %76 : vector<1x256xf32>
    %79 = math.tanh %78 : vector<1x256xf32>
    %cst_34 = arith.constant 1.000000e+00 : f32
    %80 = vector.broadcast %cst_34 : f32 to vector<1x256xf32>
    %81 = arith.addf %79, %80 : vector<1x256xf32>
    %cst_35 = arith.constant 5.000000e-01 : f32
    %82 = vector.broadcast %cst_35 : f32 to vector<1x256xf32>
    %83 = arith.mulf %82, %81 : vector<1x256xf32>
    %84 = vector.extract_strided_slice %75 {offsets = [0, 256], sizes = [1, 128], strides = [1, 1]} : vector<1x512xf32> to vector<1x128xf32>
    %85 = math.tanh %84 : vector<1x128xf32>
    %86 = vector.extract_strided_slice %75 {offsets = [0, 384], sizes = [1, 128], strides = [1, 1]} : vector<1x512xf32> to vector<1x128xf32>
    %cst_36 = arith.constant 5.000000e-01 : f32
    %87 = vector.broadcast %cst_36 : f32 to vector<1x128xf32>
    %88 = arith.mulf %87, %86 : vector<1x128xf32>
    %89 = math.tanh %88 : vector<1x128xf32>
    %cst_37 = arith.constant 1.000000e+00 : f32
    %90 = vector.broadcast %cst_37 : f32 to vector<1x128xf32>
    %91 = arith.addf %89, %90 : vector<1x128xf32>
    %cst_38 = arith.constant 5.000000e-01 : f32
    %92 = vector.broadcast %cst_38 : f32 to vector<1x128xf32>
    %93 = arith.mulf %92, %91 : vector<1x128xf32>
    %94 = vector.extract_strided_slice %83 {offsets = [0, 128], sizes = [1, 128], strides = [1, 1]} : vector<1x256xf32> to vector<1x128xf32>
    %95 = arith.mulf %94, %68 : vector<1x128xf32>
    %96 = vector.extract_strided_slice %83 {offsets = [0, 0], sizes = [1, 128], strides = [1, 1]} : vector<1x256xf32> to vector<1x128xf32>
    %97 = arith.mulf %96, %85 : vector<1x128xf32>
    %98 = arith.addf %95, %97 : vector<1x128xf32>
    %99 = math.tanh %98 : vector<1x128xf32>
    %100 = arith.mulf %93, %99 : vector<1x128xf32>
    %101 = arith.truncf %100 : vector<1x128xf32> to vector<1x128xbf16>
    %c0_39 = arith.constant 0 : index
    %c0_40 = arith.constant 0 : index
    %102 = vector.load %arg2[%c0_39, %c0_40] : memref<128x512xbf16, #tpu.memory_space<vmem>>, vector<128x512xbf16>
    %cst_41 = arith.constant dense<0.000000e+00> : vector<1x512xf32>
    %103 = tpu.matmul %101, %102, %cst_41 {dimension_numbers = #tpu.dot_dimension_numbers<[1], [0], [0], [1], [0, 0, 1, 1], [], []>} : vector<1x128xbf16>, vector<128x512xbf16>, vector<1x512xf32> -> vector<1x512xf32>
    %c3 = arith.constant 3 : index
    %c0_42 = arith.constant 0 : index
    %104 = vector.load %arg7[%c3, %c0_42] : memref<8x512xf32, #tpu.memory_space<vmem>>, vector<1x512xf32>
    %105 = arith.addf %103, %104 : vector<1x512xf32>
    %106 = vector.extract_strided_slice %105 {offsets = [0, 0], sizes = [1, 256], strides = [1, 1]} : vector<1x512xf32> to vector<1x256xf32>
    %cst_43 = arith.constant 5.000000e-01 : f32
    %107 = vector.broadcast %cst_43 : f32 to vector<1x256xf32>
    %108 = arith.mulf %107, %106 : vector<1x256xf32>
    %109 = math.tanh %108 : vector<1x256xf32>
    %cst_44 = arith.constant 1.000000e+00 : f32
    %110 = vector.broadcast %cst_44 : f32 to vector<1x256xf32>
    %111 = arith.addf %109, %110 : vector<1x256xf32>
    %cst_45 = arith.constant 5.000000e-01 : f32
    %112 = vector.broadcast %cst_45 : f32 to vector<1x256xf32>
    %113 = arith.mulf %112, %111 : vector<1x256xf32>
    %114 = vector.extract_strided_slice %105 {offsets = [0, 256], sizes = [1, 128], strides = [1, 1]} : vector<1x512xf32> to vector<1x128xf32>
    %115 = math.tanh %114 : vector<1x128xf32>
    %116 = vector.extract_strided_slice %105 {offsets = [0, 384], sizes = [1, 128], strides = [1, 1]} : vector<1x512xf32> to vector<1x128xf32>
    %cst_46 = arith.constant 5.000000e-01 : f32
    %117 = vector.broadcast %cst_46 : f32 to vector<1x128xf32>
    %118 = arith.mulf %117, %116 : vector<1x128xf32>
    %119 = math.tanh %118 : vector<1x128xf32>
    %cst_47 = arith.constant 1.000000e+00 : f32
    %120 = vector.broadcast %cst_47 : f32 to vector<1x128xf32>
    %121 = arith.addf %119, %120 : vector<1x128xf32>
    %cst_48 = arith.constant 5.000000e-01 : f32
    %122 = vector.broadcast %cst_48 : f32 to vector<1x128xf32>
    %123 = arith.mulf %122, %121 : vector<1x128xf32>
    %124 = vector.extract_strided_slice %113 {offsets = [0, 128], sizes = [1, 128], strides = [1, 1]} : vector<1x256xf32> to vector<1x128xf32>
    %125 = arith.mulf %124, %98 : vector<1x128xf32>
    %126 = vector.extract_strided_slice %113 {offsets = [0, 0], sizes = [1, 128], strides = [1, 1]} : vector<1x256xf32> to vector<1x128xf32>
    %127 = arith.mulf %126, %115 : vector<1x128xf32>
    %128 = arith.addf %125, %127 : vector<1x128xf32>
    %129 = math.tanh %128 : vector<1x128xf32>
    %130 = arith.mulf %123, %129 : vector<1x128xf32>
    %131 = arith.truncf %130 : vector<1x128xf32> to vector<1x128xbf16>
    %c0_49 = arith.constant 0 : index
    %c0_50 = arith.constant 0 : index
    %132 = vector.load %arg2[%c0_49, %c0_50] : memref<128x512xbf16, #tpu.memory_space<vmem>>, vector<128x512xbf16>
    %cst_51 = arith.constant dense<0.000000e+00> : vector<1x512xf32>
    %133 = tpu.matmul %131, %132, %cst_51 {dimension_numbers = #tpu.dot_dimension_numbers<[1], [0], [0], [1], [0, 0, 1, 1], [], []>} : vector<1x128xbf16>, vector<128x512xbf16>, vector<1x512xf32> -> vector<1x512xf32>
    %c4 = arith.constant 4 : index
    %c0_52 = arith.constant 0 : index
    %134 = vector.load %arg7[%c4, %c0_52] : memref<8x512xf32, #tpu.memory_space<vmem>>, vector<1x512xf32>
    %135 = arith.addf %133, %134 : vector<1x512xf32>
    %136 = vector.extract_strided_slice %135 {offsets = [0, 0], sizes = [1, 256], strides = [1, 1]} : vector<1x512xf32> to vector<1x256xf32>
    %cst_53 = arith.constant 5.000000e-01 : f32
    %137 = vector.broadcast %cst_53 : f32 to vector<1x256xf32>
    %138 = arith.mulf %137, %136 : vector<1x256xf32>
    %139 = math.tanh %138 : vector<1x256xf32>
    %cst_54 = arith.constant 1.000000e+00 : f32
    %140 = vector.broadcast %cst_54 : f32 to vector<1x256xf32>
    %141 = arith.addf %139, %140 : vector<1x256xf32>
    %cst_55 = arith.constant 5.000000e-01 : f32
    %142 = vector.broadcast %cst_55 : f32 to vector<1x256xf32>
    %143 = arith.mulf %142, %141 : vector<1x256xf32>
    %144 = vector.extract_strided_slice %135 {offsets = [0, 256], sizes = [1, 128], strides = [1, 1]} : vector<1x512xf32> to vector<1x128xf32>
    %145 = math.tanh %144 : vector<1x128xf32>
    %146 = vector.extract_strided_slice %135 {offsets = [0, 384], sizes = [1, 128], strides = [1, 1]} : vector<1x512xf32> to vector<1x128xf32>
    %cst_56 = arith.constant 5.000000e-01 : f32
    %147 = vector.broadcast %cst_56 : f32 to vector<1x128xf32>
    %148 = arith.mulf %147, %146 : vector<1x128xf32>
    %149 = math.tanh %148 : vector<1x128xf32>
    %cst_57 = arith.constant 1.000000e+00 : f32
    %150 = vector.broadcast %cst_57 : f32 to vector<1x128xf32>
    %151 = arith.addf %149, %150 : vector<1x128xf32>
    %cst_58 = arith.constant 5.000000e-01 : f32
    %152 = vector.broadcast %cst_58 : f32 to vector<1x128xf32>
    %153 = arith.mulf %152, %151 : vector<1x128xf32>
    %154 = vector.extract_strided_slice %143 {offsets = [0, 128], sizes = [1, 128], strides = [1, 1]} : vector<1x256xf32> to vector<1x128xf32>
    %155 = arith.mulf %154, %128 : vector<1x128xf32>
    %156 = vector.extract_strided_slice %143 {offsets = [0, 0], sizes = [1, 128], strides = [1, 1]} : vector<1x256xf32> to vector<1x128xf32>
    %157 = arith.mulf %156, %145 : vector<1x128xf32>
    %158 = arith.addf %155, %157 : vector<1x128xf32>
    %159 = math.tanh %158 : vector<1x128xf32>
    %160 = arith.mulf %153, %159 : vector<1x128xf32>
    %161 = arith.truncf %160 : vector<1x128xf32> to vector<1x128xbf16>
    %c0_59 = arith.constant 0 : index
    %c0_60 = arith.constant 0 : index
    %162 = vector.load %arg2[%c0_59, %c0_60] : memref<128x512xbf16, #tpu.memory_space<vmem>>, vector<128x512xbf16>
    %cst_61 = arith.constant dense<0.000000e+00> : vector<1x512xf32>
    %163 = tpu.matmul %161, %162, %cst_61 {dimension_numbers = #tpu.dot_dimension_numbers<[1], [0], [0], [1], [0, 0, 1, 1], [], []>} : vector<1x128xbf16>, vector<128x512xbf16>, vector<1x512xf32> -> vector<1x512xf32>
    %c5 = arith.constant 5 : index
    %c0_62 = arith.constant 0 : index
    %164 = vector.load %arg7[%c5, %c0_62] : memref<8x512xf32, #tpu.memory_space<vmem>>, vector<1x512xf32>
    %165 = arith.addf %163, %164 : vector<1x512xf32>
    %166 = vector.extract_strided_slice %165 {offsets = [0, 0], sizes = [1, 256], strides = [1, 1]} : vector<1x512xf32> to vector<1x256xf32>
    %cst_63 = arith.constant 5.000000e-01 : f32
    %167 = vector.broadcast %cst_63 : f32 to vector<1x256xf32>
    %168 = arith.mulf %167, %166 : vector<1x256xf32>
    %169 = math.tanh %168 : vector<1x256xf32>
    %cst_64 = arith.constant 1.000000e+00 : f32
    %170 = vector.broadcast %cst_64 : f32 to vector<1x256xf32>
    %171 = arith.addf %169, %170 : vector<1x256xf32>
    %cst_65 = arith.constant 5.000000e-01 : f32
    %172 = vector.broadcast %cst_65 : f32 to vector<1x256xf32>
    %173 = arith.mulf %172, %171 : vector<1x256xf32>
    %174 = vector.extract_strided_slice %165 {offsets = [0, 256], sizes = [1, 128], strides = [1, 1]} : vector<1x512xf32> to vector<1x128xf32>
    %175 = math.tanh %174 : vector<1x128xf32>
    %176 = vector.extract_strided_slice %165 {offsets = [0, 384], sizes = [1, 128], strides = [1, 1]} : vector<1x512xf32> to vector<1x128xf32>
    %cst_66 = arith.constant 5.000000e-01 : f32
    %177 = vector.broadcast %cst_66 : f32 to vector<1x128xf32>
    %178 = arith.mulf %177, %176 : vector<1x128xf32>
    %179 = math.tanh %178 : vector<1x128xf32>
    %cst_67 = arith.constant 1.000000e+00 : f32
    %180 = vector.broadcast %cst_67 : f32 to vector<1x128xf32>
    %181 = arith.addf %179, %180 : vector<1x128xf32>
    %cst_68 = arith.constant 5.000000e-01 : f32
    %182 = vector.broadcast %cst_68 : f32 to vector<1x128xf32>
    %183 = arith.mulf %182, %181 : vector<1x128xf32>
    %184 = vector.extract_strided_slice %173 {offsets = [0, 128], sizes = [1, 128], strides = [1, 1]} : vector<1x256xf32> to vector<1x128xf32>
    %185 = arith.mulf %184, %158 : vector<1x128xf32>
    %186 = vector.extract_strided_slice %173 {offsets = [0, 0], sizes = [1, 128], strides = [1, 1]} : vector<1x256xf32> to vector<1x128xf32>
    %187 = arith.mulf %186, %175 : vector<1x128xf32>
    %188 = arith.addf %185, %187 : vector<1x128xf32>
    %189 = math.tanh %188 : vector<1x128xf32>
    %190 = arith.mulf %183, %189 : vector<1x128xf32>
    %191 = arith.truncf %190 : vector<1x128xf32> to vector<1x128xbf16>
    %c0_69 = arith.constant 0 : index
    %c0_70 = arith.constant 0 : index
    %192 = vector.load %arg2[%c0_69, %c0_70] : memref<128x512xbf16, #tpu.memory_space<vmem>>, vector<128x512xbf16>
    %cst_71 = arith.constant dense<0.000000e+00> : vector<1x512xf32>
    %193 = tpu.matmul %191, %192, %cst_71 {dimension_numbers = #tpu.dot_dimension_numbers<[1], [0], [0], [1], [0, 0, 1, 1], [], []>} : vector<1x128xbf16>, vector<128x512xbf16>, vector<1x512xf32> -> vector<1x512xf32>
    %c6 = arith.constant 6 : index
    %c0_72 = arith.constant 0 : index
    %194 = vector.load %arg7[%c6, %c0_72] : memref<8x512xf32, #tpu.memory_space<vmem>>, vector<1x512xf32>
    %195 = arith.addf %193, %194 : vector<1x512xf32>
    %196 = vector.extract_strided_slice %195 {offsets = [0, 0], sizes = [1, 256], strides = [1, 1]} : vector<1x512xf32> to vector<1x256xf32>
    %cst_73 = arith.constant 5.000000e-01 : f32
    %197 = vector.broadcast %cst_73 : f32 to vector<1x256xf32>
    %198 = arith.mulf %197, %196 : vector<1x256xf32>
    %199 = math.tanh %198 : vector<1x256xf32>
    %cst_74 = arith.constant 1.000000e+00 : f32
    %200 = vector.broadcast %cst_74 : f32 to vector<1x256xf32>
    %201 = arith.addf %199, %200 : vector<1x256xf32>
    %cst_75 = arith.constant 5.000000e-01 : f32
    %202 = vector.broadcast %cst_75 : f32 to vector<1x256xf32>
    %203 = arith.mulf %202, %201 : vector<1x256xf32>
    %204 = vector.extract_strided_slice %195 {offsets = [0, 256], sizes = [1, 128], strides = [1, 1]} : vector<1x512xf32> to vector<1x128xf32>
    %205 = math.tanh %204 : vector<1x128xf32>
    %206 = vector.extract_strided_slice %195 {offsets = [0, 384], sizes = [1, 128], strides = [1, 1]} : vector<1x512xf32> to vector<1x128xf32>
    %cst_76 = arith.constant 5.000000e-01 : f32
    %207 = vector.broadcast %cst_76 : f32 to vector<1x128xf32>
    %208 = arith.mulf %207, %206 : vector<1x128xf32>
    %209 = math.tanh %208 : vector<1x128xf32>
    %cst_77 = arith.constant 1.000000e+00 : f32
    %210 = vector.broadcast %cst_77 : f32 to vector<1x128xf32>
    %211 = arith.addf %209, %210 : vector<1x128xf32>
    %cst_78 = arith.constant 5.000000e-01 : f32
    %212 = vector.broadcast %cst_78 : f32 to vector<1x128xf32>
    %213 = arith.mulf %212, %211 : vector<1x128xf32>
    %214 = vector.extract_strided_slice %203 {offsets = [0, 128], sizes = [1, 128], strides = [1, 1]} : vector<1x256xf32> to vector<1x128xf32>
    %215 = arith.mulf %214, %188 : vector<1x128xf32>
    %216 = vector.extract_strided_slice %203 {offsets = [0, 0], sizes = [1, 128], strides = [1, 1]} : vector<1x256xf32> to vector<1x128xf32>
    %217 = arith.mulf %216, %205 : vector<1x128xf32>
    %218 = arith.addf %215, %217 : vector<1x128xf32>
    %219 = math.tanh %218 : vector<1x128xf32>
    %220 = arith.mulf %213, %219 : vector<1x128xf32>
    %221 = arith.truncf %220 : vector<1x128xf32> to vector<1x128xbf16>
    %c0_79 = arith.constant 0 : index
    %c0_80 = arith.constant 0 : index
    %222 = vector.load %arg2[%c0_79, %c0_80] : memref<128x512xbf16, #tpu.memory_space<vmem>>, vector<128x512xbf16>
    %cst_81 = arith.constant dense<0.000000e+00> : vector<1x512xf32>
    %223 = tpu.matmul %221, %222, %cst_81 {dimension_numbers = #tpu.dot_dimension_numbers<[1], [0], [0], [1], [0, 0, 1, 1], [], []>} : vector<1x128xbf16>, vector<128x512xbf16>, vector<1x512xf32> -> vector<1x512xf32>
    %c7 = arith.constant 7 : index
    %c0_82 = arith.constant 0 : index
    %224 = vector.load %arg7[%c7, %c0_82] : memref<8x512xf32, #tpu.memory_space<vmem>>, vector<1x512xf32>
    %225 = arith.addf %223, %224 : vector<1x512xf32>
    %226 = vector.extract_strided_slice %225 {offsets = [0, 0], sizes = [1, 256], strides = [1, 1]} : vector<1x512xf32> to vector<1x256xf32>
    %cst_83 = arith.constant 5.000000e-01 : f32
    %227 = vector.broadcast %cst_83 : f32 to vector<1x256xf32>
    %228 = arith.mulf %227, %226 : vector<1x256xf32>
    %229 = math.tanh %228 : vector<1x256xf32>
    %cst_84 = arith.constant 1.000000e+00 : f32
    %230 = vector.broadcast %cst_84 : f32 to vector<1x256xf32>
    %231 = arith.addf %229, %230 : vector<1x256xf32>
    %cst_85 = arith.constant 5.000000e-01 : f32
    %232 = vector.broadcast %cst_85 : f32 to vector<1x256xf32>
    %233 = arith.mulf %232, %231 : vector<1x256xf32>
    %234 = vector.extract_strided_slice %225 {offsets = [0, 256], sizes = [1, 128], strides = [1, 1]} : vector<1x512xf32> to vector<1x128xf32>
    %235 = math.tanh %234 : vector<1x128xf32>
    %236 = vector.extract_strided_slice %225 {offsets = [0, 384], sizes = [1, 128], strides = [1, 1]} : vector<1x512xf32> to vector<1x128xf32>
    %cst_86 = arith.constant 5.000000e-01 : f32
    %237 = vector.broadcast %cst_86 : f32 to vector<1x128xf32>
    %238 = arith.mulf %237, %236 : vector<1x128xf32>
    %239 = math.tanh %238 : vector<1x128xf32>
    %cst_87 = arith.constant 1.000000e+00 : f32
    %240 = vector.broadcast %cst_87 : f32 to vector<1x128xf32>
    %241 = arith.addf %239, %240 : vector<1x128xf32>
    %cst_88 = arith.constant 5.000000e-01 : f32
    %242 = vector.broadcast %cst_88 : f32 to vector<1x128xf32>
    %243 = arith.mulf %242, %241 : vector<1x128xf32>
    %244 = vector.extract_strided_slice %233 {offsets = [0, 128], sizes = [1, 128], strides = [1, 1]} : vector<1x256xf32> to vector<1x128xf32>
    %245 = arith.mulf %244, %218 : vector<1x128xf32>
    %246 = vector.extract_strided_slice %233 {offsets = [0, 0], sizes = [1, 128], strides = [1, 1]} : vector<1x256xf32> to vector<1x128xf32>
    %247 = arith.mulf %246, %235 : vector<1x128xf32>
    %248 = arith.addf %245, %247 : vector<1x128xf32>
    %249 = math.tanh %248 : vector<1x128xf32>
    %250 = arith.mulf %243, %249 : vector<1x128xf32>
    %c0_89 = arith.constant 0 : index
    %c0_90 = arith.constant 0 : index
    %251 = vector.load %arg4[%c0_89, %c0_90] : memref<1x128xf32, #tpu.memory_space<vmem>>, vector<1x128xf32>
    %252 = arith.mulf %250, %251 : vector<1x128xf32>
    %cst_91 = arith.constant dense<0.000000e+00> : vector<1xf32>
    %253 = vector.multi_reduction <add>, %252, %cst_91 [1] : vector<1x128xf32> to vector<1xf32>
    %254 = vector.shape_cast %253 : vector<1xf32> to vector<1x1xf32>
    %c0_92 = arith.constant 0 : index
    %c0_93 = arith.constant 0 : index
    %255 = vector.load %arg5[%c0_92, %c0_93] : memref<1x1xf32, #tpu.memory_space<vmem>>, vector<1x1xf32>
    %256 = arith.addf %254, %255 : vector<1x1xf32>
    %c0_94 = arith.constant 0 : index
    %c0_95 = arith.constant 0 : index
    %257 = vector.load %arg6[%c0_94, %c0_95] : memref<1x1xf32, #tpu.memory_space<vmem>>, vector<1x1xf32>
    tpu.vector_store %arg6[%c0_94, %c0_95], %256 {strides = array<i32>} : memref<1x1xf32, #tpu.memory_space<vmem>>, vector<1x1xf32>,
    return
  }
}

</mosaic_0001>

<llo_original>
// kernel: lstm_forward.1
$region0: #{lstm_forward.1}
  #allocation0 [shape = 'u32[]', space=smem, size = 0x4, offset = 0x4, fixed_abs, tag = 'smem constant byte address 0x4 - core index']
  #allocation1 [shape = 'u32[144,128]{1,0:T(1,128)}', space=vmem, size = 0x12000, scoped, tag = 'internal scratch']
  #allocation2 [shape = 'f32[8,512]{1,0:T(8,128)}', space=vmem, size = 0x4000, scoped, tag = 'scratch operand']
  #allocation3 [shape = 'f32[1,1]{1,0:T(1,128)S(1)}', space=vmem, size = 0x200, scoped, tag = 'scoped memory for lstm_forward.1']
  %s0 = inlined_call_operand.vmem [shape: f32[8,1], index: 0, kind: input, shape index: {}]
  %s1 = inlined_call_operand.vmem [shape: f32[1,512], index: 1, kind: input, shape index: {}]
  %s2 = inlined_call_operand.vmem [shape: bf16[128,512], index: 2, kind: input, shape index: {}]
  %s3 = inlined_call_operand.vmem [shape: f32[1,512], index: 3, kind: input, shape index: {}]
  %s4 = inlined_call_operand.vmem [shape: f32[1,128], index: 4, kind: input, shape index: {}]
  %s5 = inlined_call_operand.<no memory space> [shape: f32[1,1], index: 5, kind: input, shape index: {}]
  %s6 = inlined_call_operand.hbm [shape: f32[1,1], index: 6, kind: output, shape index: {}]
  %s7 = sld [smem:[#allocation0]]
  $region34: #{lstm_forward.1} parent=0
    _
  %s9 = ssub.s32 1, %s7
  %s10 = scalar_select 0, %s9, %s7
  %v11 = vstv %s5
  %12 = vst [vmem:[#allocation3] sm:$0x1] %v11
  $region1: #{lstm_forward.1} parent=0
    #allocation4 [shape = 'u8[512]{0}', space=vmem, size = 0x400, scoped, tag = 'output window, operand 0, single buffered']
    #allocation5 [shape = 's32[1]{0}', space=sflag, size = 0x4, scoped, tag = 'scoped memory for lstm_forward.1']
    %13 = vsyncpa [#allocation5], 0
    // Predicated region
    $region2: #{lstm_forward.1} parent=1 // pred_check
      _
    $region3: #{lstm_forward.1} parent=1 // pred_check_branch
      %15 = sbr.rel (0) target = $region5
    $region4: #{lstm_forward.1} parent=1 // pred_region
      _
    $region5: #{lstm_forward.1} parent=1 // pred_fallthru
      _
    // Predicated region
    $region6: #{lstm_forward.1} parent=1 // pred_check
      _
    $region7: #{lstm_forward.1} parent=1 // pred_check_branch
      %17 = sbr.rel (0) target = $region9
    $region8: #{lstm_forward.1} parent=1 // pred_region
      _
    $region9: #{lstm_forward.1} parent=1 // pred_fallthru
      _
    // Predicated region
    $region10: #{lstm_forward.1} parent=1 // pred_check
      _
    $region11: #{lstm_forward.1} parent=1 // pred_check_branch
      %19 = sbr.rel (0) target = $region13
    $region12: #{lstm_forward.1} parent=1 // pred_region
      _
    $region13: #{lstm_forward.1} parent=1 // pred_fallthru
      _
    // Predicated region
    $region14: #{lstm_forward.1} parent=1 // pred_check
      _
    $region15: #{lstm_forward.1} parent=1 // pred_check_branch
      %21 = sbr.rel (0) target = $region17
    $region16: #{lstm_forward.1} parent=1 // pred_region
      _
    $region17: #{lstm_forward.1} parent=1 // pred_fallthru
      _
    // Predicated region
    $region18: #{lstm_forward.1} parent=1 // pred_check
      _
    $region19: #{lstm_forward.1} parent=1 // pred_check_branch
      %23 = sbr.rel (0) target = $region21
    $region20: #{lstm_forward.1} parent=1 // pred_region
      _
    $region21: #{lstm_forward.1} parent=1 // pred_fallthru
      _
    // Predicated region
    $region22: #{lstm_forward.1} parent=1 // pred_check
      _
    $region23: #{lstm_forward.1} parent=1 // pred_check_branch
      %25 = sbr.rel (0) target = $region25
    $region24: #{lstm_forward.1} parent=1 // pred_region
      _
    $region25: #{lstm_forward.1} parent=1 // pred_fallthru
      _
    %v27 = vld [vmem:[%s0] sm:$0xff]
    %v28 = vld [vmem:[%s1] sm:$0xf]
    %30 = vset.pattern.permute.xlu0 0
    %31 = vperm.xlu0 %30, %v27
    %v32 = vpop.permute.xlu0 %31
    %v35 = vlaneseq
    %v36 = vshrl.u32 %v35, 7
    %v37 = vsub.s32 0, %v36
    %v38 = vrot.slane %v28, %v37
    %v39 = vlaneseq
    %v40 = vshrl.u32 %v39, 7
    %v41 = vsub.s32 1, %v40
    %v42 = vrot.slane %v28, %v41
    %v43 = vlaneseq
    %v44 = vshrl.u32 %v43, 7
    %v45 = vsub.s32 2, %v44
    %v46 = vrot.slane %v28, %v45
    %v47 = vlaneseq
    %v48 = vshrl.u32 %v47, 7
    %v49 = vsub.s32 3, %v48
    %v50 = vrot.slane %v28, %v49
    %v55 = vmul.f32 %v32, %v38
    %v56 = vmul.f32 %v32, %v42
    %v57 = vmul.f32 %v32, %v46
    %v58 = vmul.f32 %v32, %v50
    %v59 = vld [vmem:[%s3] sm:$0xf]
    %v61 = vlaneseq
    %v62 = vshrl.u32 %v61, 7
    %v63 = vsub.s32 0, %v62
    %v64 = vrot.slane %v59, %v63
    %v65 = vlaneseq
    %v66 = vshrl.u32 %v65, 7
    %v67 = vsub.s32 1, %v66
    %v68 = vrot.slane %v59, %v67
    %v69 = vlaneseq
    %v70 = vshrl.u32 %v69, 7
    %v71 = vsub.s32 2, %v70
    %v72 = vrot.slane %v59, %v71
    %v73 = vlaneseq
    %v74 = vshrl.u32 %v73, 7
    %v75 = vsub.s32 3, %v74
    %v76 = vrot.slane %v59, %v75
    %v81 = vadd.f32 %v55, %v64
    %v82 = vadd.f32 %v56, %v68
    %v83 = vadd.f32 %v57, %v72
    %v84 = vadd.f32 %v58, %v76
    %85 = vst [vmem:[#allocation2] sm:$0xff] %v81
    %86 = vst [vmem:[#allocation2 + $0x8] sm:$0xff] %v82
    %87 = vst [vmem:[#allocation2 + $0x10] sm:$0xff] %v83
    %88 = vst [vmem:[#allocation2 + $0x18] sm:$0xff] %v84
    %v89 = vld [vmem:[%s2] sm:$0xff]
    %v90 = vld [vmem:[%s2 + $0x8] sm:$0xff]
    %v91 = vld [vmem:[%s2 + $0x10] sm:$0xff]
    %v92 = vld [vmem:[%s2 + $0x18] sm:$0xff]
    %v93 = vld [vmem:[%s2 + $0x20] sm:$0xff]
    %v94 = vld [vmem:[%s2 + $0x28] sm:$0xff]
    %v95 = vld [vmem:[%s2 + $0x30] sm:$0xff]
    %v96 = vld [vmem:[%s2 + $0x38] sm:$0xff]
    %v97 = vld [vmem:[%s2 + $0x40] sm:$0xff]
    %v98 = vld [vmem:[%s2 + $0x48] sm:$0xff]
    %v99 = vld [vmem:[%s2 + $0x50] sm:$0xff]
    %v100 = vld [vmem:[%s2 + $0x58] sm:$0xff]
    %v101 = vld [vmem:[%s2 + $0x60] sm:$0xff]
    %v102 = vld [vmem:[%s2 + $0x68] sm:$0xff]
    %v103 = vld [vmem:[%s2 + $0x70] sm:$0xff]
    %v104 = vld [vmem:[%s2 + $0x78] sm:$0xff]
    %v105 = vld [vmem:[%s2 + $0x80] sm:$0xff]
    %v106 = vld [vmem:[%s2 + $0x88] sm:$0xff]
    %v107 = vld [vmem:[%s2 + $0x90] sm:$0xff]
    %v108 = vld [vmem:[%s2 + $0x98] sm:$0xff]
    %v109 = vld [vmem:[%s2 + $0xa0] sm:$0xff]
    %v110 = vld [vmem:[%s2 + $0xa8] sm:$0xff]
    %v111 = vld [vmem:[%s2 + $0xb0] sm:$0xff]
    %v112 = vld [vmem:[%s2 + $0xb8] sm:$0xff]
    %v113 = vld [vmem:[%s2 + $0xc0] sm:$0xff]
    %v114 = vld [vmem:[%s2 + $0xc8] sm:$0xff]
    %v115 = vld [vmem:[%s2 + $0xd0] sm:$0xff]
    %v116 = vld [vmem:[%s2 + $0xd8] sm:$0xff]
    %v117 = vld [vmem:[%s2 + $0xe0] sm:$0xff]
    %v118 = vld [vmem:[%s2 + $0xe8] sm:$0xff]
    %v119 = vld [vmem:[%s2 + $0xf0] sm:$0xff]
    %v120 = vld [vmem:[%s2 + $0xf8] sm:$0xff]
    %v121 = vld [vmem:[#allocation2] ss:$8 sm:$0xf]
    %v154 = vunpack.c.l.b16 %v89
    %v155 = vunpack.c.h.b16 %v89
    %v156 = vunpack.c.l.b16 %v90
    %v157 = vunpack.c.h.b16 %v90
    %v158 = vunpack.c.l.b16 %v91
    %v159 = vunpack.c.h.b16 %v91
    %v160 = vunpack.c.l.b16 %v92
    %v161 = vunpack.c.h.b16 %v92
    %v162 = vunpack.c.l.b16 %v93
    %v163 = vunpack.c.h.b16 %v93
    %v164 = vunpack.c.l.b16 %v94
    %v165 = vunpack.c.h.b16 %v94
    %v166 = vunpack.c.l.b16 %v95
    %v167 = vunpack.c.h.b16 %v95
    %v168 = vunpack.c.l.b16 %v96
    %v169 = vunpack.c.h.b16 %v96
    %v170 = vunpack.c.l.b16 %v97
    %v171 = vunpack.c.h.b16 %v97
    %v172 = vunpack.c.l.b16 %v98
    %v173 = vunpack.c.h.b16 %v98
    %v174 = vunpack.c.l.b16 %v99
    %v175 = vunpack.c.h.b16 %v99
    %v176 = vunpack.c.l.b16 %v100
    %v177 = vunpack.c.h.b16 %v100
    %v178 = vunpack.c.l.b16 %v101
    %v179 = vunpack.c.h.b16 %v101
    %v180 = vunpack.c.l.b16 %v102
    %v181 = vunpack.c.h.b16 %v102
    %v182 = vunpack.c.l.b16 %v103
    %v183 = vunpack.c.h.b16 %v103
    %v184 = vunpack.c.l.b16 %v104
    %v185 = vunpack.c.h.b16 %v104
    %v186 = vunpack.c.l.b16 %v105
    %v187 = vunpack.c.h.b16 %v105
    %v188 = vunpack.c.l.b16 %v106
    %v189 = vunpack.c.h.b16 %v106
    %v190 = vunpack.c.l.b16 %v107
    %v191 = vunpack.c.h.b16 %v107
    %v192 = vunpack.c.l.b16 %v108
    %v193 = vunpack.c.h.b16 %v108
    %v194 = vunpack.c.l.b16 %v109
    %v195 = vunpack.c.h.b16 %v109
    %v196 = vunpack.c.l.b16 %v110
    %v197 = vunpack.c.h.b16 %v110
    %v198 = vunpack.c.l.b16 %v111
    %v199 = vunpack.c.h.b16 %v111
    %v200 = vunpack.c.l.b16 %v112
    %v201 = vunpack.c.h.b16 %v112
    %v202 = vunpack.c.l.b16 %v113
    %v203 = vunpack.c.h.b16 %v113
    %v204 = vunpack.c.l.b16 %v114
    %v205 = vunpack.c.h.b16 %v114
    %v206 = vunpack.c.l.b16 %v115
    %v207 = vunpack.c.h.b16 %v115
    %v208 = vunpack.c.l.b16 %v116
    %v209 = vunpack.c.h.b16 %v116
    %v210 = vunpack.c.l.b16 %v117
    %v211 = vunpack.c.h.b16 %v117
    %v212 = vunpack.c.l.b16 %v118
    %v213 = vunpack.c.h.b16 %v118
    %v214 = vunpack.c.l.b16 %v119
    %v215 = vunpack.c.h.b16 %v119
    %v216 = vunpack.c.l.b16 %v120
    %v217 = vunpack.c.h.b16 %v120
    %v218 = vpack.c.b16 %v158, %v154
    %v219 = vpack.c.b16 %v159, %v155
    %v220 = vpack.c.b16 %v160, %v156
    %v221 = vpack.c.b16 %v161, %v157
    %v222 = vpack.c.b16 %v166, %v162
    %v223 = vpack.c.b16 %v167, %v163
    %v224 = vpack.c.b16 %v168, %v164
    %v225 = vpack.c.b16 %v169, %v165
    %v226 = vpack.c.b16 %v174, %v170
    %v227 = vpack.c.b16 %v175, %v171
    %v228 = vpack.c.b16 %v176, %v172
    %v229 = vpack.c.b16 %v177, %v173
    %v230 = vpack.c.b16 %v182, %v178
    %v231 = vpack.c.b16 %v183, %v179
    %v232 = vpack.c.b16 %v184, %v180
    %v233 = vpack.c.b16 %v185, %v181
    %v234 = vpack.c.b16 %v190, %v186
    %v235 = vpack.c.b16 %v191, %v187
    %v236 = vpack.c.b16 %v192, %v188
    %v237 = vpack.c.b16 %v193, %v189
    %v238 = vpack.c.b16 %v198, %v194
    %v239 = vpack.c.b16 %v199, %v195
    %v240 = vpack.c.b16 %v200, %v196
    %v241 = vpack.c.b16 %v201, %v197
    %v242 = vpack.c.b16 %v206, %v202
    %v243 = vpack.c.b16 %v207, %v203
    %v244 = vpack.c.b16 %v208, %v204
    %v245 = vpack.c.b16 %v209, %v205
    %v246 = vpack.c.b16 %v214, %v210
    %v247 = vpack.c.b16 %v215, %v211
    %v248 = vpack.c.b16 %v216, %v212
    %v249 = vpack.c.b16 %v217, %v213
    %v283 = vlaneseq
    %v284 = vshrl.u32 %v283, 7
    %v285 = vsub.s32 0, %v284
    %v286 = vrot.slane %v121, %v285
    %v287 = vlaneseq
    %v288 = vshrl.u32 %v287, 7
    %v289 = vsub.s32 1, %v288
    %v290 = vrot.slane %v121, %v289
    %v291 = vlaneseq
    %v292 = vshrl.u32 %v291, 7
    %v293 = vsub.s32 2, %v292
    %v294 = vrot.slane %v121, %v293
    %v295 = vlaneseq
    %v296 = vshrl.u32 %v295, 7
    %v297 = vsub.s32 3, %v296
    %v298 = vrot.slane %v121, %v297
    %303 = vmatprep.subr.bf16.mxu0 %v219
    %304 = vmatpush1.bf16.msra.mxu0 %v218
    %305 = vmatprep.subr.bf16.mxu0 %v223
    %306 = vmatpush1.bf16.msra.mxu0 %v222
    %307 = vmatprep.subr.bf16.mxu0 %v227
    %308 = vmatpush1.bf16.msra.mxu0 %v226
    %309 = vmatprep.subr.bf16.mxu0 %v231
    %310 = vmatpush1.bf16.msra.mxu0 %v230
    %311 = vmatprep.subr.bf16.mxu0 %v235
    %312 = vmatpush1.bf16.msra.mxu0 %v234
    %313 = vmatprep.subr.bf16.mxu0 %v239
    %314 = vmatpush1.bf16.msra.mxu0 %v238
    %315 = vmatprep.subr.bf16.mxu0 %v243
    %316 = vmatpush1.bf16.msra.mxu0 %v242
    %317 = vmatprep.subr.bf16.mxu0 %v247
    %318 = vmatpush1.bf16.msra.mxu0 %v246
    %319 = vmatprep.subr.bf16.mxu0 0
    %320 = vmatpush1.bf16.msra.mxu0 0
    %321 = vmatprep.subr.bf16.mxu0 0
    %322 = vmatpush1.bf16.msra.mxu0 0
    %323 = vmatprep.subr.bf16.mxu0 0
    %324 = vmatpush1.bf16.msra.mxu0 0
    %325 = vmatprep.subr.bf16.mxu0 0
    %326 = vmatpush1.bf16.msra.mxu0 0
    %327 = vmatprep.subr.bf16.mxu0 0
    %328 = vmatpush1.bf16.msra.mxu0 0
    %329 = vmatprep.subr.bf16.mxu0 0
    %330 = vmatpush1.bf16.msra.mxu0 0
    %331 = vmatprep.subr.bf16.mxu0 0
    %332 = vmatpush1.bf16.msra.mxu0 0
    %333 = vmatprep.subr.bf16.mxu0 0
    %334 = vmatpush1.bf16.msra.mxu0 0
    %335 = vmatprep.mubr.bf16.mxu0 0
    %336 = vmatmul.mubr.bf16.gmra.mrb[0].mxu0 0
    %v337 = vpop.f32.mrb[0].mxu0
    %v338 = vadd.f32 %v286, %v337
    %v339 = vpop.f32.mrb[0].mxu0
    %v340 = vadd.f32 %v290, %v339
    %v341 = vpop.f32.mrb[0].mxu0
    %v342 = vpop.f32.mrb[0].mxu0
    %343 = vdwg.mxu0
    %344 = vmatprep.subr.bf16.mxu0 %v221
    %345 = vmatpush1.bf16.msra.mxu0 %v220
    %346 = vmatprep.subr.bf16.mxu0 %v225
    %347 = vmatpush1.bf16.msra.mxu0 %v224
    %348 = vmatprep.subr.bf16.mxu0 %v229
    %349 = vmatpush1.bf16.msra.mxu0 %v228
    %350 = vmatprep.subr.bf16.mxu0 %v233
    %351 = vmatpush1.bf16.msra.mxu0 %v232
    %352 = vmatprep.subr.bf16.mxu0 %v237
    %353 = vmatpush1.bf16.msra.mxu0 %v236
    %354 = vmatprep.subr.bf16.mxu0 %v241
    %355 = vmatpush1.bf16.msra.mxu0 %v240
    %356 = vmatprep.subr.bf16.mxu0 %v245
    %357 = vmatpush1.bf16.msra.mxu0 %v244
    %358 = vmatprep.subr.bf16.mxu0 %v249
    %359 = vmatpush1.bf16.msra.mxu0 %v248
    %360 = vmatprep.subr.bf16.mxu0 0
    %361 = vmatpush1.bf16.msra.mxu0 0
    %362 = vmatprep.subr.bf16.mxu0 0
    %363 = vmatpush1.bf16.msra.mxu0 0
    %364 = vmatprep.subr.bf16.mxu0 0
    %365 = vmatpush1.bf16.msra.mxu0 0
    %366 = vmatprep.subr.bf16.mxu0 0
    %367 = vmatpush1.bf16.msra.mxu0 0
    %368 = vmatprep.subr.bf16.mxu0 0
    %369 = vmatpush1.bf16.msra.mxu0 0
    %370 = vmatprep.subr.bf16.mxu0 0
    %371 = vmatpush1.bf16.msra.mxu0 0
    %372 = vmatprep.subr.bf16.mxu0 0
    %373 = vmatpush1.bf16.msra.mxu0 0
    %374 = vmatprep.subr.bf16.mxu0 0
    %375 = vmatpush1.bf16.msra.mxu0 0
    %376 = vmatprep.mubr.bf16.mxu0 0
    %377 = vmatmul.mubr.bf16.gmra.mrb[0].mxu0 0
    %v378 = vpop.f32.mrb[0].mxu0
    %v379 = vadd.f32 %v294, %v378
    %v380 = vpop.f32.mrb[0].mxu0
    %v381 = vadd.f32 %v298, %v380
    %v382 = vpop.f32.mrb[0].mxu0
    %v383 = vpop.f32.mrb[0].mxu0
    %384 = vdwg.mxu0
    %v385 = vmul.f32 %v338, 0.5
    %v386 = vmul.f32 %v340, 0.5
    %v387 = vtanh.pop %v385
    %v388 = vtanh.pop %v386
    %v389 = vadd.f32 %v387, 1.0
    %v390 = vadd.f32 %v388, 1.0
    %v391 = vmul.f32 %v389, 0.5
    %v392 = vmul.f32 %v390, 0.5
    %v393 = vtanh.pop %v379
    %v394 = vmul.f32 %v381, 0.5
    %v395 = vtanh.pop %v394
    %v396 = vadd.f32 %v395, 1.0
    %v397 = vmul.f32 %v396, 0.5
    %v398 = vmul.f32 %v392, 0.0
    %v399 = vmul.f32 %v391, %v393
    %v400 = vadd.f32 %v398, %v399
    %v401 = vtanh.pop %v400
    %v402 = vmul.f32 %v397, %v401
    %v403 = vpack.c.bf16 %v402, %v402
    %s404 = scalar_lea.vmem [#allocation2], 1
    %v405 = vld [vmem:[%s404] ss:$8 sm:$0xf]
    %v407 = vlaneseq
    %v408 = vshrl.u32 %v407, 7
    %v409 = vsub.s32 0, %v408
    %v410 = vrot.slane %v405, %v409
    %v411 = vlaneseq
    %v412 = vshrl.u32 %v411, 7
    %v413 = vsub.s32 1, %v412
    %v414 = vrot.slane %v405, %v413
    %v415 = vlaneseq
    %v416 = vshrl.u32 %v415, 7
    %v417 = vsub.s32 2, %v416
    %v418 = vrot.slane %v405, %v417
    %v419 = vlaneseq
    %v420 = vshrl.u32 %v419, 7
    %v421 = vsub.s32 3, %v420
    %v422 = vrot.slane %v405, %v421
    %427 = vmatprep.subr.bf16.mxu0 %v219
    %428 = vmatpush1.bf16.msra.mxu0 %v218
    %429 = vmatprep.subr.bf16.mxu0 %v223
    %430 = vmatpush1.bf16.msra.mxu0 %v222
    %431 = vmatprep.subr.bf16.mxu0 %v227
    %432 = vmatpush1.bf16.msra.mxu0 %v226
    %433 = vmatprep.subr.bf16.mxu0 %v231
    %434 = vmatpush1.bf16.msra.mxu0 %v230
    %435 = vmatprep.subr.bf16.mxu0 %v235
    %436 = vmatpush1.bf16.msra.mxu0 %v234
    %437 = vmatprep.subr.bf16.mxu0 %v239
    %438 = vmatpush1.bf16.msra.mxu0 %v238
    %439 = vmatprep.subr.bf16.mxu0 %v243
    %440 = vmatpush1.bf16.msra.mxu0 %v242
    %441 = vmatprep.subr.bf16.mxu0 %v247
    %442 = vmatpush1.bf16.msra.mxu0 %v246
    %443 = vmatprep.subr.bf16.mxu0 0
    %444 = vmatpush1.bf16.msra.mxu0 0
    %445 = vmatprep.subr.bf16.mxu0 0
    %446 = vmatpush1.bf16.msra.mxu0 0
    %447 = vmatprep.subr.bf16.mxu0 0
    %448 = vmatpush1.bf16.msra.mxu0 0
    %449 = vmatprep.subr.bf16.mxu0 0
    %450 = vmatpush1.bf16.msra.mxu0 0
    %451 = vmatprep.subr.bf16.mxu0 0
    %452 = vmatpush1.bf16.msra.mxu0 0
    %453 = vmatprep.subr.bf16.mxu0 0
    %454 = vmatpush1.bf16.msra.mxu0 0
    %455 = vmatprep.subr.bf16.mxu0 0
    %456 = vmatpush1.bf16.msra.mxu0 0
    %457 = vmatprep.subr.bf16.mxu0 0
    %458 = vmatpush1.bf16.msra.mxu0 0
    %459 = vmatprep.mubr.bf16.mxu0 0
    %460 = vmatmul.mubr.bf16.gmra.mrb[0].mxu0 %v403
    %v461 = vpop.f32.mrb[0].mxu0
    %v462 = vadd.f32 %v410, %v461
    %v463 = vpop.f32.mrb[0].mxu0
    %v464 = vadd.f32 %v414, %v463
    %v465 = vpop.f32.mrb[0].mxu0
    %v466 = vpop.f32.mrb[0].mxu0
    %467 = vdwg.mxu0
    %468 = vmatprep.subr.bf16.mxu0 %v221
    %469 = vmatpush1.bf16.msra.mxu0 %v220
    %470 = vmatprep.subr.bf16.mxu0 %v225
    %471 = vmatpush1.bf16.msra.mxu0 %v224
    %472 = vmatprep.subr.bf16.mxu0 %v229
    %473 = vmatpush1.bf16.msra.mxu0 %v228
    %474 = vmatprep.subr.bf16.mxu0 %v233
    %475 = vmatpush1.bf16.msra.mxu0 %v232
    %476 = vmatprep.subr.bf16.mxu0 %v237
    %477 = vmatpush1.bf16.msra.mxu0 %v236
    %478 = vmatprep.subr.bf16.mxu0 %v241
    %479 = vmatpush1.bf16.msra.mxu0 %v240
    %480 = vmatprep.subr.bf16.mxu0 %v245
    %481 = vmatpush1.bf16.msra.mxu0 %v244
    %482 = vmatprep.subr.bf16.mxu0 %v249
    %483 = vmatpush1.bf16.msra.mxu0 %v248
    %484 = vmatprep.subr.bf16.mxu0 0
    %485 = vmatpush1.bf16.msra.mxu0 0
    %486 = vmatprep.subr.bf16.mxu0 0
    %487 = vmatpush1.bf16.msra.mxu0 0
    %488 = vmatprep.subr.bf16.mxu0 0
    %489 = vmatpush1.bf16.msra.mxu0 0
    %490 = vmatprep.subr.bf16.mxu0 0
    %491 = vmatpush1.bf16.msra.mxu0 0
    %492 = vmatprep.subr.bf16.mxu0 0
    %493 = vmatpush1.bf16.msra.mxu0 0
    %494 = vmatprep.subr.bf16.mxu0 0
    %495 = vmatpush1.bf16.msra.mxu0 0
    %496 = vmatprep.subr.bf16.mxu0 0
    %497 = vmatpush1.bf16.msra.mxu0 0
    %498 = vmatprep.subr.bf16.mxu0 0
    %499 = vmatpush1.bf16.msra.mxu0 0
    %500 = vmatprep.mubr.bf16.mxu0 0
    %501 = vmatmul.mubr.bf16.gmra.mrb[0].mxu0 %v403
    %v502 = vpop.f32.mrb[0].mxu0
    %v503 = vadd.f32 %v418, %v502
    %v504 = vpop.f32.mrb[0].mxu0
    %v505 = vadd.f32 %v422, %v504
    %v506 = vpop.f32.mrb[0].mxu0
    %v507 = vpop.f32.mrb[0].mxu0
    %508 = vdwg.mxu0
    %v509 = vmul.f32 %v462, 0.5
    %v510 = vmul.f32 %v464, 0.5
    %v511 = vtanh.pop %v509
    %v512 = vtanh.pop %v510
    %v513 = vadd.f32 %v511, 1.0
    %v514 = vadd.f32 %v512, 1.0
    %v515 = vmul.f32 %v513, 0.5
    %v516 = vmul.f32 %v514, 0.5
    %v517 = vtanh.pop %v503
    %v518 = vmul.f32 %v505, 0.5
    %v519 = vtanh.pop %v518
    %v520 = vadd.f32 %v519, 1.0
    %v521 = vmul.f32 %v520, 0.5
    %v522 = vmul.f32 %v516, %v400
    %v523 = vmul.f32 %v515, %v517
    %v524 = vadd.f32 %v522, %v523
    %v525 = vtanh.pop %v524
    %v526 = vmul.f32 %v521, %v525
    %v527 = vpack.c.bf16 %v526, %v526
    %s528 = scalar_lea.vmem [#allocation2], 2
    %v529 = vld [vmem:[%s528] ss:$8 sm:$0xf]
    %v531 = vlaneseq
    %v532 = vshrl.u32 %v531, 7
    %v533 = vsub.s32 0, %v532
    %v534 = vrot.slane %v529, %v533
    %v535 = vlaneseq
    %v536 = vshrl.u32 %v535, 7
    %v537 = vsub.s32 1, %v536
    %v538 = vrot.slane %v529, %v537
    %v539 = vlaneseq
    %v540 = vshrl.u32 %v539, 7
    %v541 = vsub.s32 2, %v540
    %v542 = vrot.slane %v529, %v541
    %v543 = vlaneseq
    %v544 = vshrl.u32 %v543, 7
    %v545 = vsub.s32 3, %v544
    %v546 = vrot.slane %v529, %v545
    %551 = vmatprep.subr.bf16.mxu0 %v219
    %552 = vmatpush1.bf16.msra.mxu0 %v218
    %553 = vmatprep.subr.bf16.mxu0 %v223
    %554 = vmatpush1.bf16.msra.mxu0 %v222
    %555 = vmatprep.subr.bf16.mxu0 %v227
    %556 = vmatpush1.bf16.msra.mxu0 %v226
    %557 = vmatprep.subr.bf16.mxu0 %v231
    %558 = vmatpush1.bf16.msra.mxu0 %v230
    %559 = vmatprep.subr.bf16.mxu0 %v235
    %560 = vmatpush1.bf16.msra.mxu0 %v234
    %561 = vmatprep.subr.bf16.mxu0 %v239
    %562 = vmatpush1.bf16.msra.mxu0 %v238
    %563 = vmatprep.subr.bf16.mxu0 %v243
    %564 = vmatpush1.bf16.msra.mxu0 %v242
    %565 = vmatprep.subr.bf16.mxu0 %v247
    %566 = vmatpush1.bf16.msra.mxu0 %v246
    %567 = vmatprep.subr.bf16.mxu0 0
    %568 = vmatpush1.bf16.msra.mxu0 0
    %569 = vmatprep.subr.bf16.mxu0 0
    %570 = vmatpush1.bf16.msra.mxu0 0
    %571 = vmatprep.subr.bf16.mxu0 0
    %572 = vmatpush1.bf16.msra.mxu0 0
    %573 = vmatprep.subr.bf16.mxu0 0
    %574 = vmatpush1.bf16.msra.mxu0 0
    %575 = vmatprep.subr.bf16.mxu0 0
    %576 = vmatpush1.bf16.msra.mxu0 0
    %577 = vmatprep.subr.bf16.mxu0 0
    %578 = vmatpush1.bf16.msra.mxu0 0
    %579 = vmatprep.subr.bf16.mxu0 0
    %580 = vmatpush1.bf16.msra.mxu0 0
    %581 = vmatprep.subr.bf16.mxu0 0
    %582 = vmatpush1.bf16.msra.mxu0 0
    %583 = vmatprep.mubr.bf16.mxu0 0
    %584 = vmatmul.mubr.bf16.gmra.mrb[0].mxu0 %v527
    %v585 = vpop.f32.mrb[0].mxu0
    %v586 = vadd.f32 %v534, %v585
    %v587 = vpop.f32.mrb[0].mxu0
    %v588 = vadd.f32 %v538, %v587
    %v589 = vpop.f32.mrb[0].mxu0
    %v590 = vpop.f32.mrb[0].mxu0
    %591 = vdwg.mxu0
    %592 = vmatprep.subr.bf16.mxu0 %v221
    %593 = vmatpush1.bf16.msra.mxu0 %v220
    %594 = vmatprep.subr.bf16.mxu0 %v225
    %595 = vmatpush1.bf16.msra.mxu0 %v224
    %596 = vmatprep.subr.bf16.mxu0 %v229
    %597 = vmatpush1.bf16.msra.mxu0 %v228
    %598 = vmatprep.subr.bf16.mxu0 %v233
    %599 = vmatpush1.bf16.msra.mxu0 %v232
    %600 = vmatprep.subr.bf16.mxu0 %v237
    %601 = vmatpush1.bf16.msra.mxu0 %v236
    %602 = vmatprep.subr.bf16.mxu0 %v241
    %603 = vmatpush1.bf16.msra.mxu0 %v240
    %604 = vmatprep.subr.bf16.mxu0 %v245
    %605 = vmatpush1.bf16.msra.mxu0 %v244
    %606 = vmatprep.subr.bf16.mxu0 %v249
    %607 = vmatpush1.bf16.msra.mxu0 %v248
    %608 = vmatprep.subr.bf16.mxu0 0
    %609 = vmatpush1.bf16.msra.mxu0 0
    %610 = vmatprep.subr.bf16.mxu0 0
    %611 = vmatpush1.bf16.msra.mxu0 0
    %612 = vmatprep.subr.bf16.mxu0 0
    %613 = vmatpush1.bf16.msra.mxu0 0
    %614 = vmatprep.subr.bf16.mxu0 0
    %615 = vmatpush1.bf16.msra.mxu0 0
    %616 = vmatprep.subr.bf16.mxu0 0
    %617 = vmatpush1.bf16.msra.mxu0 0
    %618 = vmatprep.subr.bf16.mxu0 0
    %619 = vmatpush1.bf16.msra.mxu0 0
    %620 = vmatprep.subr.bf16.mxu0 0
    %621 = vmatpush1.bf16.msra.mxu0 0
    %622 = vmatprep.subr.bf16.mxu0 0
    %623 = vmatpush1.bf16.msra.mxu0 0
    %624 = vmatprep.mubr.bf16.mxu0 0
    %625 = vmatmul.mubr.bf16.gmra.mrb[0].mxu0 %v527
    %v626 = vpop.f32.mrb[0].mxu0
    %v627 = vadd.f32 %v542, %v626
    %v628 = vpop.f32.mrb[0].mxu0
    %v629 = vadd.f32 %v546, %v628
    %v630 = vpop.f32.mrb[0].mxu0
    %v631 = vpop.f32.mrb[0].mxu0
    %632 = vdwg.mxu0
    %v633 = vmul.f32 %v586, 0.5
    %v634 = vmul.f32 %v588, 0.5
    %v635 = vtanh.pop %v633
    %v636 = vtanh.pop %v634
    %v637 = vadd.f32 %v635, 1.0
    %v638 = vadd.f32 %v636, 1.0
    %v639 = vmul.f32 %v637, 0.5
    %v640 = vmul.f32 %v638, 0.5
    %v641 = vtanh.pop %v627
    %v642 = vmul.f32 %v629, 0.5
    %v643 = vtanh.pop %v642
    %v644 = vadd.f32 %v643, 1.0
    %v645 = vmul.f32 %v644, 0.5
    %v646 = vmul.f32 %v640, %v524
    %v647 = vmul.f32 %v639, %v641
    %v648 = vadd.f32 %v646, %v647
    %v649 = vtanh.pop %v648
    %v650 = vmul.f32 %v645, %v649
    %v651 = vpack.c.bf16 %v650, %v650
    %s652 = scalar_lea.vmem [#allocation2], 3
    %v653 = vld [vmem:[%s652] ss:$8 sm:$0xf]
    %v655 = vlaneseq
    %v656 = vshrl.u32 %v655, 7
    %v657 = vsub.s32 0, %v656
    %v658 = vrot.slane %v653, %v657
    %v659 = vlaneseq
    %v660 = vshrl.u32 %v659, 7
    %v661 = vsub.s32 1, %v660
    %v662 = vrot.slane %v653, %v661
    %v663 = vlaneseq
    %v664 = vshrl.u32 %v663, 7
    %v665 = vsub.s32 2, %v664
    %v666 = vrot.slane %v653, %v665
    %v667 = vlaneseq
    %v668 = vshrl.u32 %v667, 7
    %v669 = vsub.s32 3, %v668
    %v670 = vrot.slane %v653, %v669
    %675 = vmatprep.subr.bf16.mxu0 %v219
    %676 = vmatpush1.bf16.msra.mxu0 %v218
    %677 = vmatprep.subr.bf16.mxu0 %v223
    %678 = vmatpush1.bf16.msra.mxu0 %v222
    %679 = vmatprep.subr.bf16.mxu0 %v227
    %680 = vmatpush1.bf16.msra.mxu0 %v226
    %681 = vmatprep.subr.bf16.mxu0 %v231
    %682 = vmatpush1.bf16.msra.mxu0 %v230
    %683 = vmatprep.subr.bf16.mxu0 %v235
    %684 = vmatpush1.bf16.msra.mxu0 %v234
    %685 = vmatprep.subr.bf16.mxu0 %v239
    %686 = vmatpush1.bf16.msra.mxu0 %v238
    %687 = vmatprep.subr.bf16.mxu0 %v243
    %688 = vmatpush1.bf16.msra.mxu0 %v242
    %689 = vmatprep.subr.bf16.mxu0 %v247
    %690 = vmatpush1.bf16.msra.mxu0 %v246
    %691 = vmatprep.subr.bf16.mxu0 0
    %692 = vmatpush1.bf16.msra.mxu0 0
    %693 = vmatprep.subr.bf16.mxu0 0
    %694 = vmatpush1.bf16.msra.mxu0 0
    %695 = vmatprep.subr.bf16.mxu0 0
    %696 = vmatpush1.bf16.msra.mxu0 0
    %697 = vmatprep.subr.bf16.mxu0 0
    %698 = vmatpush1.bf16.msra.mxu0 0
    %699 = vmatprep.subr.bf16.mxu0 0
    %700 = vmatpush1.bf16.msra.mxu0 0
    %701 = vmatprep.subr.bf16.mxu0 0
    %702 = vmatpush1.bf16.msra.mxu0 0
    %703 = vmatprep.subr.bf16.mxu0 0
    %704 = vmatpush1.bf16.msra.mxu0 0
    %705 = vmatprep.subr.bf16.mxu0 0
    %706 = vmatpush1.bf16.msra.mxu0 0
    %707 = vmatprep.mubr.bf16.mxu0 0
    %708 = vmatmul.mubr.bf16.gmra.mrb[0].mxu0 %v651
    %v709 = vpop.f32.mrb[0].mxu0
    %v710 = vadd.f32 %v658, %v709
    %v711 = vpop.f32.mrb[0].mxu0
    %v712 = vadd.f32 %v662, %v711
    %v713 = vpop.f32.mrb[0].mxu0
    %v714 = vpop.f32.mrb[0].mxu0
    %715 = vdwg.mxu0
    %716 = vmatprep.subr.bf16.mxu0 %v221
    %717 = vmatpush1.bf16.msra.mxu0 %v220
    %718 = vmatprep.subr.bf16.mxu0 %v225
    %719 = vmatpush1.bf16.msra.mxu0 %v224
    %720 = vmatprep.subr.bf16.mxu0 %v229
    %721 = vmatpush1.bf16.msra.mxu0 %v228
    %722 = vmatprep.subr.bf16.mxu0 %v233
    %723 = vmatpush1.bf16.msra.mxu0 %v232
    %724 = vmatprep.subr.bf16.mxu0 %v237
    %725 = vmatpush1.bf16.msra.mxu0 %v236
    %726 = vmatprep.subr.bf16.mxu0 %v241
    %727 = vmatpush1.bf16.msra.mxu0 %v240
    %728 = vmatprep.subr.bf16.mxu0 %v245
    %729 = vmatpush1.bf16.msra.mxu0 %v244
    %730 = vmatprep.subr.bf16.mxu0 %v249
    %731 = vmatpush1.bf16.msra.mxu0 %v248
    %732 = vmatprep.subr.bf16.mxu0 0
    %733 = vmatpush1.bf16.msra.mxu0 0
    %734 = vmatprep.subr.bf16.mxu0 0
    %735 = vmatpush1.bf16.msra.mxu0 0
    %736 = vmatprep.subr.bf16.mxu0 0
    %737 = vmatpush1.bf16.msra.mxu0 0
    %738 = vmatprep.subr.bf16.mxu0 0
    %739 = vmatpush1.bf16.msra.mxu0 0
    %740 = vmatprep.subr.bf16.mxu0 0
    %741 = vmatpush1.bf16.msra.mxu0 0
    %742 = vmatprep.subr.bf16.mxu0 0
    %743 = vmatpush1.bf16.msra.mxu0 0
    %744 = vmatprep.subr.bf16.mxu0 0
    %745 = vmatpush1.bf16.msra.mxu0 0
    %746 = vmatprep.subr.bf16.mxu0 0
    %747 = vmatpush1.bf16.msra.mxu0 0
    %748 = vmatprep.mubr.bf16.mxu0 0
    %749 = vmatmul.mubr.bf16.gmra.mrb[0].mxu0 %v651
    %v750 = vpop.f32.mrb[0].mxu0
    %v751 = vadd.f32 %v666, %v750
    %v752 = vpop.f32.mrb[0].mxu0
    %v753 = vadd.f32 %v670, %v752
    %v754 = vpop.f32.mrb[0].mxu0
    %v755 = vpop.f32.mrb[0].mxu0
    %756 = vdwg.mxu0
    %v757 = vmul.f32 %v710, 0.5
    %v758 = vmul.f32 %v712, 0.5
    %v759 = vtanh.pop %v757
    %v760 = vtanh.pop %v758
    %v761 = vadd.f32 %v759, 1.0
    %v762 = vadd.f32 %v760, 1.0
    %v763 = vmul.f32 %v761, 0.5
    %v764 = vmul.f32 %v762, 0.5
    %v765 = vtanh.pop %v751
    %v766 = vmul.f32 %v753, 0.5
    %v767 = vtanh.pop %v766
    %v768 = vadd.f32 %v767, 1.0
    %v769 = vmul.f32 %v768, 0.5
    %v770 = vmul.f32 %v764, %v648
    %v771 = vmul.f32 %v763, %v765
    %v772 = vadd.f32 %v770, %v771
    %v773 = vtanh.pop %v772
    %v774 = vmul.f32 %v769, %v773
    %v775 = vpack.c.bf16 %v774, %v774
    %s776 = scalar_lea.vmem [#allocation2], 4
    %v777 = vld [vmem:[%s776] ss:$8 sm:$0xf]
    %v779 = vlaneseq
    %v780 = vshrl.u32 %v779, 7
    %v781 = vsub.s32 0, %v780
    %v782 = vrot.slane %v777, %v781
    %v783 = vlaneseq
    %v784 = vshrl.u32 %v783, 7
    %v785 = vsub.s32 1, %v784
    %v786 = vrot.slane %v777, %v785
    %v787 = vlaneseq
    %v788 = vshrl.u32 %v787, 7
    %v789 = vsub.s32 2, %v788
    %v790 = vrot.slane %v777, %v789
    %v791 = vlaneseq
    %v792 = vshrl.u32 %v791, 7
    %v793 = vsub.s32 3, %v792
    %v794 = vrot.slane %v777, %v793
    %799 = vmatprep.subr.bf16.mxu0 %v219
    %800 = vmatpush1.bf16.msra.mxu0 %v218
    %801 = vmatprep.subr.bf16.mxu0 %v223
    %802 = vmatpush1.bf16.msra.mxu0 %v222
    %803 = vmatprep.subr.bf16.mxu0 %v227
    %804 = vmatpush1.bf16.msra.mxu0 %v226
    %805 = vmatprep.subr.bf16.mxu0 %v231
    %806 = vmatpush1.bf16.msra.mxu0 %v230
    %807 = vmatprep.subr.bf16.mxu0 %v235
    %808 = vmatpush1.bf16.msra.mxu0 %v234
    %809 = vmatprep.subr.bf16.mxu0 %v239
    %810 = vmatpush1.bf16.msra.mxu0 %v238
    %811 = vmatprep.subr.bf16.mxu0 %v243
    %812 = vmatpush1.bf16.msra.mxu0 %v242
    %813 = vmatprep.subr.bf16.mxu0 %v247
    %814 = vmatpush1.bf16.msra.mxu0 %v246
    %815 = vmatprep.subr.bf16.mxu0 0
    %816 = vmatpush1.bf16.msra.mxu0 0
    %817 = vmatprep.subr.bf16.mxu0 0
    %818 = vmatpush1.bf16.msra.mxu0 0
    %819 = vmatprep.subr.bf16.mxu0 0
    %820 = vmatpush1.bf16.msra.mxu0 0
    %821 = vmatprep.subr.bf16.mxu0 0
    %822 = vmatpush1.bf16.msra.mxu0 0
    %823 = vmatprep.subr.bf16.mxu0 0
    %824 = vmatpush1.bf16.msra.mxu0 0
    %825 = vmatprep.subr.bf16.mxu0 0
    %826 = vmatpush1.bf16.msra.mxu0 0
    %827 = vmatprep.subr.bf16.mxu0 0
    %828 = vmatpush1.bf16.msra.mxu0 0
    %829 = vmatprep.subr.bf16.mxu0 0
    %830 = vmatpush1.bf16.msra.mxu0 0
    %831 = vmatprep.mubr.bf16.mxu0 0
    %832 = vmatmul.mubr.bf16.gmra.mrb[0].mxu0 %v775
    %v833 = vpop.f32.mrb[0].mxu0
    %v834 = vadd.f32 %v782, %v833
    %v835 = vpop.f32.mrb[0].mxu0
    %v836 = vadd.f32 %v786, %v835
    %v837 = vpop.f32.mrb[0].mxu0
    %v838 = vpop.f32.mrb[0].mxu0
    %839 = vdwg.mxu0
    %840 = vmatprep.subr.bf16.mxu0 %v221
    %841 = vmatpush1.bf16.msra.mxu0 %v220
    %842 = vmatprep.subr.bf16.mxu0 %v225
    %843 = vmatpush1.bf16.msra.mxu0 %v224
    %844 = vmatprep.subr.bf16.mxu0 %v229
    %845 = vmatpush1.bf16.msra.mxu0 %v228
    %846 = vmatprep.subr.bf16.mxu0 %v233
    %847 = vmatpush1.bf16.msra.mxu0 %v232
    %848 = vmatprep.subr.bf16.mxu0 %v237
    %849 = vmatpush1.bf16.msra.mxu0 %v236
    %850 = vmatprep.subr.bf16.mxu0 %v241
    %851 = vmatpush1.bf16.msra.mxu0 %v240
    %852 = vmatprep.subr.bf16.mxu0 %v245
    %853 = vmatpush1.bf16.msra.mxu0 %v244
    %854 = vmatprep.subr.bf16.mxu0 %v249
    %855 = vmatpush1.bf16.msra.mxu0 %v248
    %856 = vmatprep.subr.bf16.mxu0 0
    %857 = vmatpush1.bf16.msra.mxu0 0
    %858 = vmatprep.subr.bf16.mxu0 0
    %859 = vmatpush1.bf16.msra.mxu0 0
    %860 = vmatprep.subr.bf16.mxu0 0
    %861 = vmatpush1.bf16.msra.mxu0 0
    %862 = vmatprep.subr.bf16.mxu0 0
    %863 = vmatpush1.bf16.msra.mxu0 0
    %864 = vmatprep.subr.bf16.mxu0 0
    %865 = vmatpush1.bf16.msra.mxu0 0
    %866 = vmatprep.subr.bf16.mxu0 0
    %867 = vmatpush1.bf16.msra.mxu0 0
    %868 = vmatprep.subr.bf16.mxu0 0
    %869 = vmatpush1.bf16.msra.mxu0 0
    %870 = vmatprep.subr.bf16.mxu0 0
    %871 = vmatpush1.bf16.msra.mxu0 0
    %872 = vmatprep.mubr.bf16.mxu0 0
    %873 = vmatmul.mubr.bf16.gmra.mrb[0].mxu0 %v775
    %v874 = vpop.f32.mrb[0].mxu0
    %v875 = vadd.f32 %v790, %v874
    %v876 = vpop.f32.mrb[0].mxu0
    %v877 = vadd.f32 %v794, %v876
    %v878 = vpop.f32.mrb[0].mxu0
    %v879 = vpop.f32.mrb[0].mxu0
    %880 = vdwg.mxu0
    %v881 = vmul.f32 %v834, 0.5
    %v882 = vmul.f32 %v836, 0.5
    %v883 = vtanh.pop %v881
    %v884 = vtanh.pop %v882
    %v885 = vadd.f32 %v883, 1.0
    %v886 = vadd.f32 %v884, 1.0
    %v887 = vmul.f32 %v885, 0.5
    %v888 = vmul.f32 %v886, 0.5
    %v889 = vtanh.pop %v875
    %v890 = vmul.f32 %v877, 0.5
    %v891 = vtanh.pop %v890
    %v892 = vadd.f32 %v891, 1.0
    %v893 = vmul.f32 %v892, 0.5
    %v894 = vmul.f32 %v888, %v772
    %v895 = vmul.f32 %v887, %v889
    %v896 = vadd.f32 %v894, %v895
    %v897 = vtanh.pop %v896
    %v898 = vmul.f32 %v893, %v897
    %v899 = vpack.c.bf16 %v898, %v898
    %s900 = scalar_lea.vmem [#allocation2], 5
    %v901 = vld [vmem:[%s900] ss:$8 sm:$0xf]
    %v903 = vlaneseq
    %v904 = vshrl.u32 %v903, 7
    %v905 = vsub.s32 0, %v904
    %v906 = vrot.slane %v901, %v905
    %v907 = vlaneseq
    %v908 = vshrl.u32 %v907, 7
    %v909 = vsub.s32 1, %v908
    %v910 = vrot.slane %v901, %v909
    %v911 = vlaneseq
    %v912 = vshrl.u32 %v911, 7
    %v913 = vsub.s32 2, %v912
    %v914 = vrot.slane %v901, %v913
    %v915 = vlaneseq
    %v916 = vshrl.u32 %v915, 7
    %v917 = vsub.s32 3, %v916
    %v918 = vrot.slane %v901, %v917
    %923 = vmatprep.subr.bf16.mxu0 %v219
    %924 = vmatpush1.bf16.msra.mxu0 %v218
    %925 = vmatprep.subr.bf16.mxu0 %v223
    %926 = vmatpush1.bf16.msra.mxu0 %v222
    %927 = vmatprep.subr.bf16.mxu0 %v227
    %928 = vmatpush1.bf16.msra.mxu0 %v226
    %929 = vmatprep.subr.bf16.mxu0 %v231
    %930 = vmatpush1.bf16.msra.mxu0 %v230
    %931 = vmatprep.subr.bf16.mxu0 %v235
    %932 = vmatpush1.bf16.msra.mxu0 %v234
    %933 = vmatprep.subr.bf16.mxu0 %v239
    %934 = vmatpush1.bf16.msra.mxu0 %v238
    %935 = vmatprep.subr.bf16.mxu0 %v243
    %936 = vmatpush1.bf16.msra.mxu0 %v242
    %937 = vmatprep.subr.bf16.mxu0 %v247
    %938 = vmatpush1.bf16.msra.mxu0 %v246
    %939 = vmatprep.subr.bf16.mxu0 0
    %940 = vmatpush1.bf16.msra.mxu0 0
    %941 = vmatprep.subr.bf16.mxu0 0
    %942 = vmatpush1.bf16.msra.mxu0 0
    %943 = vmatprep.subr.bf16.mxu0 0
    %944 = vmatpush1.bf16.msra.mxu0 0
    %945 = vmatprep.subr.bf16.mxu0 0
    %946 = vmatpush1.bf16.msra.mxu0 0
    %947 = vmatprep.subr.bf16.mxu0 0
    %948 = vmatpush1.bf16.msra.mxu0 0
    %949 = vmatprep.subr.bf16.mxu0 0
    %950 = vmatpush1.bf16.msra.mxu0 0
    %951 = vmatprep.subr.bf16.mxu0 0
    %952 = vmatpush1.bf16.msra.mxu0 0
    %953 = vmatprep.subr.bf16.mxu0 0
    %954 = vmatpush1.bf16.msra.mxu0 0
    %955 = vmatprep.mubr.bf16.mxu0 0
    %956 = vmatmul.mubr.bf16.gmra.mrb[0].mxu0 %v899
    %v957 = vpop.f32.mrb[0].mxu0
    %v958 = vadd.f32 %v906, %v957
    %v959 = vpop.f32.mrb[0].mxu0
    %v960 = vadd.f32 %v910, %v959
    %v961 = vpop.f32.mrb[0].mxu0
    %v962 = vpop.f32.mrb[0].mxu0
    %963 = vdwg.mxu0
    %964 = vmatprep.subr.bf16.mxu0 %v221
    %965 = vmatpush1.bf16.msra.mxu0 %v220
    %966 = vmatprep.subr.bf16.mxu0 %v225
    %967 = vmatpush1.bf16.msra.mxu0 %v224
    %968 = vmatprep.subr.bf16.mxu0 %v229
    %969 = vmatpush1.bf16.msra.mxu0 %v228
    %970 = vmatprep.subr.bf16.mxu0 %v233
    %971 = vmatpush1.bf16.msra.mxu0 %v232
    %972 = vmatprep.subr.bf16.mxu0 %v237
    %973 = vmatpush1.bf16.msra.mxu0 %v236
    %974 = vmatprep.subr.bf16.mxu0 %v241
    %975 = vmatpush1.bf16.msra.mxu0 %v240
    %976 = vmatprep.subr.bf16.mxu0 %v245
    %977 = vmatpush1.bf16.msra.mxu0 %v244
    %978 = vmatprep.subr.bf16.mxu0 %v249
    %979 = vmatpush1.bf16.msra.mxu0 %v248
    %980 = vmatprep.subr.bf16.mxu0 0
    %981 = vmatpush1.bf16.msra.mxu0 0
    %982 = vmatprep.subr.bf16.mxu0 0
    %983 = vmatpush1.bf16.msra.mxu0 0
    %984 = vmatprep.subr.bf16.mxu0 0
    %985 = vmatpush1.bf16.msra.mxu0 0
    %986 = vmatprep.subr.bf16.mxu0 0
    %987 = vmatpush1.bf16.msra.mxu0 0
    %988 = vmatprep.subr.bf16.mxu0 0
    %989 = vmatpush1.bf16.msra.mxu0 0
    %990 = vmatprep.subr.bf16.mxu0 0
    %991 = vmatpush1.bf16.msra.mxu0 0
    %992 = vmatprep.subr.bf16.mxu0 0
    %993 = vmatpush1.bf16.msra.mxu0 0
    %994 = vmatprep.subr.bf16.mxu0 0
    %995 = vmatpush1.bf16.msra.mxu0 0
    %996 = vmatprep.mubr.bf16.mxu0 0
    %997 = vmatmul.mubr.bf16.gmra.mrb[0].mxu0 %v899
    %v998 = vpop.f32.mrb[0].mxu0
    %v999 = vadd.f32 %v914, %v998
    %v1000 = vpop.f32.mrb[0].mxu0
    %v1001 = vadd.f32 %v918, %v1000
    %v1002 = vpop.f32.mrb[0].mxu0
    %v1003 = vpop.f32.mrb[0].mxu0
    %1004 = vdwg.mxu0
    %v1005 = vmul.f32 %v958, 0.5
    %v1006 = vmul.f32 %v960, 0.5
    %v1007 = vtanh.pop %v1005
    %v1008 = vtanh.pop %v1006
    %v1009 = vadd.f32 %v1007, 1.0
    %v1010 = vadd.f32 %v1008, 1.0
    %v1011 = vmul.f32 %v1009, 0.5
    %v1012 = vmul.f32 %v1010, 0.5
    %v1013 = vtanh.pop %v999
    %v1014 = vmul.f32 %v1001, 0.5
    %v1015 = vtanh.pop %v1014
    %v1016 = vadd.f32 %v1015, 1.0
    %v1017 = vmul.f32 %v1016, 0.5
    %v1018 = vmul.f32 %v1012, %v896
    %v1019 = vmul.f32 %v1011, %v1013
    %v1020 = vadd.f32 %v1018, %v1019
    %v1021 = vtanh.pop %v1020
    %v1022 = vmul.f32 %v1017, %v1021
    %v1023 = vpack.c.bf16 %v1022, %v1022
    %s1024 = scalar_lea.vmem [#allocation2], 6
    %v1025 = vld [vmem:[%s1024] ss:$8 sm:$0xf]
    %v1027 = vlaneseq
    %v1028 = vshrl.u32 %v1027, 7
    %v1029 = vsub.s32 0, %v1028
    %v1030 = vrot.slane %v1025, %v1029
    %v1031 = vlaneseq
    %v1032 = vshrl.u32 %v1031, 7
    %v1033 = vsub.s32 1, %v1032
    %v1034 = vrot.slane %v1025, %v1033
    %v1035 = vlaneseq
    %v1036 = vshrl.u32 %v1035, 7
    %v1037 = vsub.s32 2, %v1036
    %v1038 = vrot.slane %v1025, %v1037
    %v1039 = vlaneseq
    %v1040 = vshrl.u32 %v1039, 7
    %v1041 = vsub.s32 3, %v1040
    %v1042 = vrot.slane %v1025, %v1041
    %1047 = vmatprep.subr.bf16.mxu0 %v219
    %1048 = vmatpush1.bf16.msra.mxu0 %v218
    %1049 = vmatprep.subr.bf16.mxu0 %v223
    %1050 = vmatpush1.bf16.msra.mxu0 %v222
    %1051 = vmatprep.subr.bf16.mxu0 %v227
    %1052 = vmatpush1.bf16.msra.mxu0 %v226
    %1053 = vmatprep.subr.bf16.mxu0 %v231
    %1054 = vmatpush1.bf16.msra.mxu0 %v230
    %1055 = vmatprep.subr.bf16.mxu0 %v235
    %1056 = vmatpush1.bf16.msra.mxu0 %v234
    %1057 = vmatprep.subr.bf16.mxu0 %v239
    %1058 = vmatpush1.bf16.msra.mxu0 %v238
    %1059 = vmatprep.subr.bf16.mxu0 %v243
    %1060 = vmatpush1.bf16.msra.mxu0 %v242
    %1061 = vmatprep.subr.bf16.mxu0 %v247
    %1062 = vmatpush1.bf16.msra.mxu0 %v246
    %1063 = vmatprep.subr.bf16.mxu0 0
    %1064 = vmatpush1.bf16.msra.mxu0 0
    %1065 = vmatprep.subr.bf16.mxu0 0
    %1066 = vmatpush1.bf16.msra.mxu0 0
    %1067 = vmatprep.subr.bf16.mxu0 0
    %1068 = vmatpush1.bf16.msra.mxu0 0
    %1069 = vmatprep.subr.bf16.mxu0 0
    %1070 = vmatpush1.bf16.msra.mxu0 0
    %1071 = vmatprep.subr.bf16.mxu0 0
    %1072 = vmatpush1.bf16.msra.mxu0 0
    %1073 = vmatprep.subr.bf16.mxu0 0
    %1074 = vmatpush1.bf16.msra.mxu0 0
    %1075 = vmatprep.subr.bf16.mxu0 0
    %1076 = vmatpush1.bf16.msra.mxu0 0
    %1077 = vmatprep.subr.bf16.mxu0 0
    %1078 = vmatpush1.bf16.msra.mxu0 0
    %1079 = vmatprep.mubr.bf16.mxu0 0
    %1080 = vmatmul.mubr.bf16.gmra.mrb[0].mxu0 %v1023
    %v1081 = vpop.f32.mrb[0].mxu0
    %v1082 = vadd.f32 %v1030, %v1081
    %v1083 = vpop.f32.mrb[0].mxu0
    %v1084 = vadd.f32 %v1034, %v1083
    %v1085 = vpop.f32.mrb[0].mxu0
    %v1086 = vpop.f32.mrb[0].mxu0
    %1087 = vdwg.mxu0
    %1088 = vmatprep.subr.bf16.mxu0 %v221
    %1089 = vmatpush1.bf16.msra.mxu0 %v220
    %1090 = vmatprep.subr.bf16.mxu0 %v225
    %1091 = vmatpush1.bf16.msra.mxu0 %v224
    %1092 = vmatprep.subr.bf16.mxu0 %v229
    %1093 = vmatpush1.bf16.msra.mxu0 %v228
    %1094 = vmatprep.subr.bf16.mxu0 %v233
    %1095 = vmatpush1.bf16.msra.mxu0 %v232
    %1096 = vmatprep.subr.bf16.mxu0 %v237
    %1097 = vmatpush1.bf16.msra.mxu0 %v236
    %1098 = vmatprep.subr.bf16.mxu0 %v241
    %1099 = vmatpush1.bf16.msra.mxu0 %v240
    %1100 = vmatprep.subr.bf16.mxu0 %v245
    %1101 = vmatpush1.bf16.msra.mxu0 %v244
    %1102 = vmatprep.subr.bf16.mxu0 %v249
    %1103 = vmatpush1.bf16.msra.mxu0 %v248
    %1104 = vmatprep.subr.bf16.mxu0 0
    %1105 = vmatpush1.bf16.msra.mxu0 0
    %1106 = vmatprep.subr.bf16.mxu0 0
    %1107 = vmatpush1.bf16.msra.mxu0 0
    %1108 = vmatprep.subr.bf16.mxu0 0
    %1109 = vmatpush1.bf16.msra.mxu0 0
    %1110 = vmatprep.subr.bf16.mxu0 0
    %1111 = vmatpush1.bf16.msra.mxu0 0
    %1112 = vmatprep.subr.bf16.mxu0 0
    %1113 = vmatpush1.bf16.msra.mxu0 0
    %1114 = vmatprep.subr.bf16.mxu0 0
    %1115 = vmatpush1.bf16.msra.mxu0 0
    %1116 = vmatprep.subr.bf16.mxu0 0
    %1117 = vmatpush1.bf16.msra.mxu0 0
    %1118 = vmatprep.subr.bf16.mxu0 0
    %1119 = vmatpush1.bf16.msra.mxu0 0
    %1120 = vmatprep.mubr.bf16.mxu0 0
    %1121 = vmatmul.mubr.bf16.gmra.mrb[0].mxu0 %v1023
    %v1122 = vpop.f32.mrb[0].mxu0
    %v1123 = vadd.f32 %v1038, %v1122
    %v1124 = vpop.f32.mrb[0].mxu0
    %v1125 = vadd.f32 %v1042, %v1124
    %v1126 = vpop.f32.mrb[0].mxu0
    %v1127 = vpop.f32.mrb[0].mxu0
    %1128 = vdwg.mxu0
    %v1129 = vmul.f32 %v1082, 0.5
    %v1130 = vmul.f32 %v1084, 0.5
    %v1131 = vtanh.pop %v1129
    %v1132 = vtanh.pop %v1130
    %v1133 = vadd.f32 %v1131, 1.0
    %v1134 = vadd.f32 %v1132, 1.0
    %v1135 = vmul.f32 %v1133, 0.5
    %v1136 = vmul.f32 %v1134, 0.5
    %v1137 = vtanh.pop %v1123
    %v1138 = vmul.f32 %v1125, 0.5
    %v1139 = vtanh.pop %v1138
    %v1140 = vadd.f32 %v1139, 1.0
    %v1141 = vmul.f32 %v1140, 0.5
    %v1142 = vmul.f32 %v1136, %v1020
    %v1143 = vmul.f32 %v1135, %v1137
    %v1144 = vadd.f32 %v1142, %v1143
    %v1145 = vtanh.pop %v1144
    %v1146 = vmul.f32 %v1141, %v1145
    %v1147 = vpack.c.bf16 %v1146, %v1146
    %s1148 = scalar_lea.vmem [#allocation2], 7
    %v1149 = vld [vmem:[%s1148] ss:$8 sm:$0xf]
    %v1151 = vlaneseq
    %v1152 = vshrl.u32 %v1151, 7
    %v1153 = vsub.s32 0, %v1152
    %v1154 = vrot.slane %v1149, %v1153
    %v1155 = vlaneseq
    %v1156 = vshrl.u32 %v1155, 7
    %v1157 = vsub.s32 1, %v1156
    %v1158 = vrot.slane %v1149, %v1157
    %v1159 = vlaneseq
    %v1160 = vshrl.u32 %v1159, 7
    %v1161 = vsub.s32 2, %v1160
    %v1162 = vrot.slane %v1149, %v1161
    %v1163 = vlaneseq
    %v1164 = vshrl.u32 %v1163, 7
    %v1165 = vsub.s32 3, %v1164
    %v1166 = vrot.slane %v1149, %v1165
    %1171 = vmatprep.subr.bf16.mxu0 %v219
    %1172 = vmatpush1.bf16.msra.mxu0 %v218
    %1173 = vmatprep.subr.bf16.mxu0 %v223
    %1174 = vmatpush1.bf16.msra.mxu0 %v222
    %1175 = vmatprep.subr.bf16.mxu0 %v227
    %1176 = vmatpush1.bf16.msra.mxu0 %v226
    %1177 = vmatprep.subr.bf16.mxu0 %v231
    %1178 = vmatpush1.bf16.msra.mxu0 %v230
    %1179 = vmatprep.subr.bf16.mxu0 %v235
    %1180 = vmatpush1.bf16.msra.mxu0 %v234
    %1181 = vmatprep.subr.bf16.mxu0 %v239
    %1182 = vmatpush1.bf16.msra.mxu0 %v238
    %1183 = vmatprep.subr.bf16.mxu0 %v243
    %1184 = vmatpush1.bf16.msra.mxu0 %v242
    %1185 = vmatprep.subr.bf16.mxu0 %v247
    %1186 = vmatpush1.bf16.msra.mxu0 %v246
    %1187 = vmatprep.subr.bf16.mxu0 0
    %1188 = vmatpush1.bf16.msra.mxu0 0
    %1189 = vmatprep.subr.bf16.mxu0 0
    %1190 = vmatpush1.bf16.msra.mxu0 0
    %1191 = vmatprep.subr.bf16.mxu0 0
    %1192 = vmatpush1.bf16.msra.mxu0 0
    %1193 = vmatprep.subr.bf16.mxu0 0
    %1194 = vmatpush1.bf16.msra.mxu0 0
    %1195 = vmatprep.subr.bf16.mxu0 0
    %1196 = vmatpush1.bf16.msra.mxu0 0
    %1197 = vmatprep.subr.bf16.mxu0 0
    %1198 = vmatpush1.bf16.msra.mxu0 0
    %1199 = vmatprep.subr.bf16.mxu0 0
    %1200 = vmatpush1.bf16.msra.mxu0 0
    %1201 = vmatprep.subr.bf16.mxu0 0
    %1202 = vmatpush1.bf16.msra.mxu0 0
    %1203 = vmatprep.mubr.bf16.mxu0 0
    %1204 = vmatmul.mubr.bf16.gmra.mrb[0].mxu0 %v1147
    %v1205 = vpop.f32.mrb[0].mxu0
    %v1206 = vadd.f32 %v1154, %v1205
    %v1207 = vpop.f32.mrb[0].mxu0
    %v1208 = vadd.f32 %v1158, %v1207
    %v1209 = vpop.f32.mrb[0].mxu0
    %v1210 = vpop.f32.mrb[0].mxu0
    %1211 = vdwg.mxu0
    %1212 = vmatprep.subr.bf16.mxu0 %v221
    %1213 = vmatpush1.bf16.msra.mxu0 %v220
    %1214 = vmatprep.subr.bf16.mxu0 %v225
    %1215 = vmatpush1.bf16.msra.mxu0 %v224
    %1216 = vmatprep.subr.bf16.mxu0 %v229
    %1217 = vmatpush1.bf16.msra.mxu0 %v228
    %1218 = vmatprep.subr.bf16.mxu0 %v233
    %1219 = vmatpush1.bf16.msra.mxu0 %v232
    %1220 = vmatprep.subr.bf16.mxu0 %v237
    %1221 = vmatpush1.bf16.msra.mxu0 %v236
    %1222 = vmatprep.subr.bf16.mxu0 %v241
    %1223 = vmatpush1.bf16.msra.mxu0 %v240
    %1224 = vmatprep.subr.bf16.mxu0 %v245
    %1225 = vmatpush1.bf16.msra.mxu0 %v244
    %1226 = vmatprep.subr.bf16.mxu0 %v249
    %1227 = vmatpush1.bf16.msra.mxu0 %v248
    %1228 = vmatprep.subr.bf16.mxu0 0
    %1229 = vmatpush1.bf16.msra.mxu0 0
    %1230 = vmatprep.subr.bf16.mxu0 0
    %1231 = vmatpush1.bf16.msra.mxu0 0
    %1232 = vmatprep.subr.bf16.mxu0 0
    %1233 = vmatpush1.bf16.msra.mxu0 0
    %1234 = vmatprep.subr.bf16.mxu0 0
    %1235 = vmatpush1.bf16.msra.mxu0 0
    %1236 = vmatprep.subr.bf16.mxu0 0
    %1237 = vmatpush1.bf16.msra.mxu0 0
    %1238 = vmatprep.subr.bf16.mxu0 0
    %1239 = vmatpush1.bf16.msra.mxu0 0
    %1240 = vmatprep.subr.bf16.mxu0 0
    %1241 = vmatpush1.bf16.msra.mxu0 0
    %1242 = vmatprep.subr.bf16.mxu0 0
    %1243 = vmatpush1.bf16.msra.mxu0 0
    %1244 = vmatprep.mubr.bf16.mxu0 0
    %1245 = vmatmul.mubr.bf16.gmra.mrb[0].mxu0 %v1147
    %v1246 = vpop.f32.mrb[0].mxu0
    %v1247 = vadd.f32 %v1162, %v1246
    %v1248 = vpop.f32.mrb[0].mxu0
    %v1249 = vadd.f32 %v1166, %v1248
    %v1250 = vpop.f32.mrb[0].mxu0
    %v1251 = vpop.f32.mrb[0].mxu0
    %1252 = vdwg.mxu0
    %v1253 = vmul.f32 %v1206, 0.5
    %v1254 = vmul.f32 %v1208, 0.5
    %v1255 = vtanh.pop %v1253
    %v1256 = vtanh.pop %v1254
    %v1257 = vadd.f32 %v1255, 1.0
    %v1258 = vadd.f32 %v1256, 1.0
    %v1259 = vmul.f32 %v1257, 0.5
    %v1260 = vmul.f32 %v1258, 0.5
    %v1261 = vtanh.pop %v1247
    %v1262 = vmul.f32 %v1249, 0.5
    %v1263 = vtanh.pop %v1262
    %v1264 = vadd.f32 %v1263, 1.0
    %v1265 = vmul.f32 %v1264, 0.5
    %v1266 = vmul.f32 %v1260, %v1144
    %v1267 = vmul.f32 %v1259, %v1261
    %v1268 = vadd.f32 %v1266, %v1267
    %v1269 = vtanh.pop %v1268
    %v1270 = vmul.f32 %v1265, %v1269
    %v1271 = vld [vmem:[%s4] sm:$0x1]
    %v1272 = vmul.f32 %v1270, %v1271
    %vm1273 = vcmask 1040384
    %v1274 = vsel %vm1273, %v1272, 0.0
    %1275 = vadd.xlane.f32.xlu0 %v1274
    %v1276 = vpop.xlane.xlu0 %1275
    %v1277 = vld [vmem:[#allocation3] sm:$0x1]
    %v1278 = vadd.f32 %v1276, %v1277
    %vm1279 = vcmask 0
    %1280 = vst.msk [vmem:[#allocation4] sm:$0x1] %vm1279, %v1278
    // Predicated region
    $region26: #{lstm_forward.1} parent=1 // pred_check
      _
    $region27: #{lstm_forward.1} parent=1 // pred_check_branch
      %1282 = sbr.rel (0) target = $region29
    $region28: #{lstm_forward.1} parent=1 // pred_region
      %s1284 = ssub.s32 16, 16
      %1285 = vsyncadd [#allocation5], %s1284
      %s1287 = sshll.u32 [#allocation4], 4
      %s1288 = int_to_ptr.vmem [resolvable:$true] %s1287
      %1290 = dma.vmem_to_hbm [thread:$0]  %s1288, 16, %s6, [#allocation5]
    $region29: #{lstm_forward.1} parent=1 // pred_fallthru
      _
    // Predicated region
    $region30: #{lstm_forward.1} parent=1 // pred_check
      _
    $region31: #{lstm_forward.1} parent=1 // pred_check_branch
      %1292 = sbr.rel (0) target = $region33
    $region32: #{lstm_forward.1} parent=1 // pred_region
      %1293 = dma.done [#allocation5], 16
    $region33: #{lstm_forward.1} parent=1 // pred_fallthru
      _
    %1294 = vsyncpa [#allocation5], 1

</llo_original>
